<compile_context>
chip_gen: v7x
topology: tpu7x:2x2x1
jax: 0.10.0
libtpu: 0.0.40
codegen_flags: <defaults>
</compile_context>

<pallas_src>
import functools
from typing import List, Optional

import jax
import jax.numpy as jnp
from jax.experimental import pallas as pl
from jax.experimental.pallas import tpu as pltpu


# Masks per grid step (raised from 8 per perf feedback; shrunk for tiny inputs).
_TM = 32


def _pick_tm(n: int) -> int:
    """Full _TM for realistic proposal counts; multiple-of-8 shrink for tiny inputs."""
    return int(min(_TM, max(8, ((n + 7) // 8) * 8)))


def _grid_split(num_chunks: int):
    """(G, S): outer 'parallel' group axis (v7x 2-TC split) x inner sequential chunks."""
    g = 2 if num_chunks >= 2 else 1
    s = (num_chunks + g - 1) // g
    return g, s


# ----------------------------------------------------------------------------
# Minimal Instances container (stands in for detectron2.structures.Instances)
# ----------------------------------------------------------------------------
class Instances:
    def __init__(self,
                 pred_classes: Optional[jnp.ndarray] = None,
                 gt_classes: Optional[jnp.ndarray] = None,
                 gt_masks: Optional[jnp.ndarray] = None):
        self.pred_classes = pred_classes
        self.gt_classes = gt_classes
        # TODO(synk): detectron2 gt_masks.crop_and_resize(proposal_boxes, mask_side_len)
        # (ROIAlign rasterization of polygon masks) has no clean Pallas equivalent; gt_masks
        # here are assumed already cropped/resized to (n, H, W) float arrays.
        self.gt_masks = gt_masks
        self.pred_masks = None

    def __len__(self):
        for a in (self.pred_classes, self.gt_classes, self.gt_masks):
            if a is not None:
                return int(a.shape[0])
        return 0


# ----------------------------------------------------------------------------
# Manual class-gather DMA helpers (double-buffered)
# ----------------------------------------------------------------------------
def _issue_gather(cls_ref, x_hbm, stage, sem, chunk, slot, tm, n_valid):
    """Start TM row-gather DMAs logits[row, cls[row], :] -> stage[slot, m, :].

    All SMEM class-id reads happen here, i.e. strictly BEFORE any sem.wait() on the
    in-flight chunk (avoids breaking SMEM sst->sld forwarding).
    """
    for m in range(tm):                                   # static unroll, tm small & fixed
        row = jnp.minimum(chunk * tm + m, n_valid - 1)    # clamp padded rows in-bounds
        c = cls_ref[row]                                  # SMEM scalar read (prefetched)
        pltpu.make_async_copy(
            x_hbm.at[row, pl.ds(c, 1)],                   # (1, HW) row in HBM
            stage.at[slot, pl.ds(m, 1)],                  # (1, HW) row in VMEM stage
            sem.at[slot, m]).start()


def _wait_gather(x_hbm, stage, sem, slot, tm):
    for m in range(tm):
        pltpu.make_async_copy(
            x_hbm.at[0, pl.ds(0, 1)],                     # shape-matching dummy src
            stage.at[slot, pl.ds(m, 1)],
            sem.at[slot, m]).wait()


# ----------------------------------------------------------------------------
# Pallas kernels
# ----------------------------------------------------------------------------
def _gather_sigmoid_kernel(cls_ref, x_hbm, o_ref, stage, sem, *, tm, n_valid, s_chunks):
    g = pl.program_id(0)
    s = pl.program_id(1)
    chunk = g * s_chunks + s

    @pl.when(s == 0)
    def _():  # prime slot 0 at the start of each group
        _issue_gather(cls_ref, x_hbm, stage, sem, chunk, 0, tm, n_valid)

    @pl.when(s + 1 < s_chunks)
    def _():  # prefetch next chunk into the other slot BEFORE waiting on this one
        _issue_gather(cls_ref, x_hbm, stage, sem, chunk + 1, (s + 1) % 2, tm, n_valid)

    slot = s % 2
    _wait_gather(x_hbm, stage, sem, slot, tm)

    o_ref[...] = jax.nn.sigmoid(stage[slot].astype(jnp.float32)).astype(o_ref.dtype)


def _sigmoid_agnostic_kernel(x_ref, o_ref):
    # C == 1 fast path: pure streaming, auto-pipelined, no manual gather DMAs.
    o_ref[...] = jax.nn.sigmoid(x_ref[...].astype(jnp.float32)).astype(o_ref.dtype)


def _bce_gather_kernel(cls_ref, x_hbm, gt_ref, o_ref, stage, sem, *,
                       tm, hw, n_valid, s_chunks, mask_pad):
    g = pl.program_id(0)
    s = pl.program_id(1)
    chunk = g * s_chunks + s

    @pl.when(s == 0)
    def _():
        _issue_gather(cls_ref, x_hbm, stage, sem, chunk, 0, tm, n_valid)

    @pl.when(s + 1 < s_chunks)
    def _():
        _issue_gather(cls_ref, x_hbm, stage, sem, chunk + 1, (s + 1) % 2, tm, n_valid)

    slot = s % 2
    _wait_gather(x_hbm, stage, sem, slot, tm)

    x = stage[slot].astype(jnp.float32)     # (TM, HW) gathered class logits
    y = gt_ref[...].astype(jnp.float32)     # (TM, HW)
    # Numerically stable BCE-with-logits (matches F.binary_cross_entropy_with_logits).
    loss = jnp.maximum(x, 0.0) - x * y + jnp.log1p(jnp.exp(-jnp.abs(x)))

    if mask_pad:  # static: only emitted when padded rows exist
        row = jax.lax.broadcasted_iota(jnp.int32, (tm, hw), 0) + chunk * tm
        loss = jnp.where(row < n_valid, loss, 0.0)

    # Per-group resident accumulator (output block constant across the "arbitrary" axis).
    @pl.when(s == 0)
    def _():
        o_ref[...] = jnp.zeros_like(o_ref)
    o_ref[...] += jnp.sum(loss, axis=0, keepdims=True).reshape(1, 1, hw)


def _bce_agnostic_kernel(x_ref, gt_ref, o_ref, *, tm, hw, n_valid, s_chunks, mask_pad):
    g = pl.program_id(0)
    s = pl.program_id(1)
    chunk = g * s_chunks + s

    x = x_ref[...].astype(jnp.float32)
    y = gt_ref[...].astype(jnp.float32)
    loss = jnp.maximum(x, 0.0) - x * y + jnp.log1p(jnp.exp(-jnp.abs(x)))

    if mask_pad:
        row = jax.lax.broadcasted_iota(jnp.int32, (tm, hw), 0) + chunk * tm
        loss = jnp.where(row < n_valid, loss, 0.0)

    @pl.when(s == 0)
    def _():
        o_ref[...] = jnp.zeros_like(o_ref)
    o_ref[...] += jnp.sum(loss, axis=0, keepdims=True).reshape(1, 1, hw)


# ----------------------------------------------------------------------------
# Wrappers
# ----------------------------------------------------------------------------
def gather_sigmoid(logits: jnp.ndarray, classes: jnp.ndarray) -> jnp.ndarray:
    """sigmoid(logits[n, classes[n]]) -> (N, 1, H, W)."""
    N, C, H, W = logits.shape
    HW = H * W
    tm = _pick_tm(N)

    if C == 1:
        # cls-agnostic fast path: no gather needed.
        num_chunks = (N + tm - 1) // tm
        n_pad = num_chunks * tm
        xs = logits.reshape(N, HW)
        if n_pad != N:
            xs = jnp.pad(xs, ((0, n_pad - N), (0, 0)))
        out = pl.pallas_call(
            _sigmoid_agnostic_kernel,
            out_shape=jax.ShapeDtypeStruct((n_pad, HW), jnp.float32),
            grid=(num_chunks,),
            in_specs=[pl.BlockSpec((tm, HW), lambda i: (i, 0))],
            out_specs=pl.BlockSpec((tm, HW), lambda i: (i, 0)),
            compiler_params=pltpu.CompilerParams(dimension_semantics=("parallel",)),
        )(xs)
        return out[:N].reshape(N, 1, H, W)

    assert classes.shape[0] == N, (
        f"class count {classes.shape[0]} must match pred mask count {N}")
    classes = jnp.clip(classes.astype(jnp.int32), 0, C - 1)   # guard OOB class ids
    x = logits.reshape(N, C, HW)                               # lane-dense layout

    num_chunks = (N + tm - 1) // tm
    G, S = _grid_split(num_chunks)
    n_pad = G * S * tm

    kernel = functools.partial(_gather_sigmoid_kernel, tm=tm, n_valid=N, s_chunks=S)
    out = pl.pallas_call(
        kernel,
        out_shape=jax.ShapeDtypeStruct((n_pad, HW), jnp.float32),
        grid_spec=pltpu.PrefetchScalarGridSpec(
            num_scalar_prefetch=1,
            grid=(G, S),
            in_specs=[pl.BlockSpec(memory_space=pl.ANY)],      # raw HBM ref, manual gather
            out_specs=pl.BlockSpec((tm, HW), lambda g, s, cls: (g * S + s, 0)),
            scratch_shapes=[pltpu.VMEM((2, tm, HW), logits.dtype),   # double-buffered stage
                            pltpu.SemaphoreType.DMA((2, tm))],
        ),
        compiler_params=pltpu.CompilerParams(
            dimension_semantics=("parallel", "arbitrary")),
    )(classes, x)
    return out[:N].reshape(N, 1, H, W)


def bce_with_logits_mean(logits: jnp.ndarray,
                         classes: jnp.ndarray,
                         gt_masks: jnp.ndarray) -> jnp.ndarray:
    """mean(BCEWithLogits(logits[n, classes[n]], gt_masks[n])) over all N*H*W elements."""
    N, C, H, W = logits.shape
    HW = H * W
    gt = gt_masks.reshape(-1, HW).astype(jnp.float32)
    assert gt.shape[0] == N, (
        f"gt mask count {gt.shape[0]} must match pred mask count {N}")

    tm = _pick_tm(N)
    num_chunks = (N + tm - 1) // tm
    G, S = _grid_split(num_chunks)
    n_pad = G * S * tm
    mask_pad = (n_pad != N)
    if mask_pad:
        gt = jnp.pad(gt, ((0, n_pad - N), (0, 0)))

    if C == 1:
        xs = logits.reshape(N, HW)
        if mask_pad:
            xs = jnp.pad(xs, ((0, n_pad - N), (0, 0)))
        kernel = functools.partial(_bce_agnostic_kernel, tm=tm, hw=HW, n_valid=N,
                                   s_chunks=S, mask_pad=mask_pad)
        partials = pl.pallas_call(
            kernel,
            out_shape=jax.ShapeDtypeStruct((G, 1, HW), jnp.float32),
            grid=(G, S),
            in_specs=[pl.BlockSpec((tm, HW), lambda g, s: (g * S + s, 0)),
                      pl.BlockSpec((tm, HW), lambda g, s: (g * S + s, 0))],
            out_specs=pl.BlockSpec((1, 1, HW), lambda g, s: (g, 0, 0)),
            compiler_params=pltpu.CompilerParams(
                dimension_semantics=("parallel", "arbitrary")),
        )(xs, gt)
        return jnp.sum(partials) * (1.0 / float(N * H * W))

    assert classes.shape[0] == N, (
        f"class count {classes.shape[0]} must match pred mask count {N}")
    classes = jnp.clip(classes.astype(jnp.int32), 0, C - 1)
    x = logits.reshape(N, C, HW)

    kernel = functools.partial(_bce_gather_kernel, tm=tm, hw=HW, n_valid=N,
                               s_chunks=S, mask_pad=mask_pad)
    partials = pl.pallas_call(
        kernel,
        out_shape=jax.ShapeDtypeStruct((G, 1, HW), jnp.float32),
        grid_spec=pltpu.PrefetchScalarGridSpec(
            num_scalar_prefetch=1,
            grid=(G, S),
            in_specs=[pl.BlockSpec(memory_space=pl.ANY),                   # logits in HBM
                      pl.BlockSpec((tm, HW), lambda g, s, cls: (g * S + s, 0))],  # gt
            out_specs=pl.BlockSpec((1, 1, HW), lambda g, s, cls: (g, 0, 0)),
            scratch_shapes=[pltpu.VMEM((2, tm, HW), logits.dtype),
                            pltpu.SemaphoreType.DMA((2, tm))],
        ),
        compiler_params=pltpu.CompilerParams(
            dimension_semantics=("parallel", "arbitrary")),
    )(classes, x, gt)
    return jnp.sum(partials) * (1.0 / float(N * H * W))


# ----------------------------------------------------------------------------
# mask_rcnn_loss / mask_rcnn_inference (JAX glue around the Pallas kernels)
# ----------------------------------------------------------------------------
def mask_rcnn_loss(pred_mask_logits: jnp.ndarray, instances: List[Instances]) -> jnp.ndarray:
    N, C, H, W = pred_mask_logits.shape
    assert H == W, 'All masks must be in 1:1 ratio'
    cls_agnostic_mask = (C == 1)

    valid = [i for i in instances if len(i) > 0]
    if len(valid) == 0:
        return jnp.sum(pred_mask_logits) * 0.0

    gt_masks = jnp.concatenate([i.gt_masks for i in valid], axis=0).astype(jnp.float32)
    if cls_agnostic_mask:
        classes = jnp.zeros((N,), jnp.int32)
    else:
        classes = jnp.concatenate([i.gt_classes for i in valid], axis=0).astype(jnp.int32)

    # TODO(synk): mask_accuracy / false_positive / false_negative are host-side .item()
    # logging stats in the torch source and are never returned; omitted here.
    return bce_with_logits_mean(pred_mask_logits, classes, gt_masks)


def mask_rcnn_inference(pred_mask_logits: jnp.ndarray, pred_instances: List[Instances]):
    N, C, H, W = pred_mask_logits.shape
    if N == 0:
        empty = jnp.zeros((0, 1, H, W), jnp.float32)
        for inst in pred_instances:
            inst.pred_masks = empty
        return

    if C == 1:
        classes = jnp.zeros((N,), jnp.int32)
    else:
        classes = jnp.concatenate(
            [i.pred_classes for i in pred_instances], axis=0).astype(jnp.int32)

    mask_probs_pred = gather_sigmoid(pred_mask_logits, classes)  # (N, 1, H, W)

    offset = 0
    for inst in pred_instances:
        n = len(inst)
        inst.pred_masks = mask_probs_pred[offset:offset + n]
        offset += n


# ----------------------------------------------------------------------------
# Base_Mask_RCNN_Head equivalent
# ----------------------------------------------------------------------------
class BaseMaskRCNNHead:
    def __init__(self, *, loss_weights: float = 1.0, training: bool = True):
        self.loss_weights = loss_weights
        self.training = training

    def layers(self, x):
        # TODO(synk): base class declares layers() as NotImplementedError (no parameters in
        # __init__); identity is used here so the forward-pass semantics below are exercised.
        return x

    def __call__(self, x, instances: List[Instances]):
        x = self.layers(x)
        if self.training:
            return {'loss_mask': mask_rcnn_loss(x, instances) * self.loss_weights}
        else:
            mask_rcnn_inference(x, instances)
            return instances


# ----------------------------------------------------------------------------
# Main
# ----------------------------------------------------------------------------
if __name__ == "__main__":
    import numpy as np

    key = jax.random.PRNGKey(0)

    # ---- class-specific head: N=8 masks, C=4 classes, 16x16 masks ----
    N, C, H, W = 8, 4, 16, 16
    k1, k2, k3, k4 = jax.random.split(key, 4)

    x = jax.random.normal(k1, (N, C, H, W), dtype=jnp.float32)
    classes = jax.random.randint(k2, (N,), 0, C, dtype=jnp.int32)
    gt_masks = (jax.random.uniform(k3, (N, H, W)) > 0.5).astype(jnp.float32)

    # Two "images" with 5 and 3 instances.
    instances = [
        Instances(pred_classes=classes[:5], gt_classes=classes[:5], gt_masks=gt_masks[:5]),
        Instances(pred_classes=classes[5:], gt_classes=classes[5:], gt_masks=gt_masks[5:]),
    ]

    head_train = BaseMaskRCNNHead(loss_weights=1.0, training=True)
    head_eval = BaseMaskRCNNHead(loss_weights=1.0, training=False)

    # --- training path ---
    loss = jax.block_until_ready(head_train(x, instances)['loss_mask'])
    sel = x[jnp.arange(N), classes]
    ref_loss = jnp.mean(jnp.maximum(sel, 0.0) - sel * gt_masks
                        + jnp.log1p(jnp.exp(-jnp.abs(sel))))
    np.testing.assert_allclose(np.asarray(loss), np.asarray(ref_loss), rtol=1e-5, atol=1e-5)

    # --- inference path ---
    out_instances = head_eval(x, instances)
    probs = jax.block_until_ready(
        jnp.concatenate([i.pred_masks for i in out_instances], axis=0))
    ref_probs = jax.nn.sigmoid(sel)[:, None]
    np.testing.assert_allclose(np.asarray(probs), np.asarray(ref_probs), rtol=1e-5, atol=1e-5)

    # ---- class-agnostic head (C == 1) fast path: N=5 masks ----
    N1 = 5
    x1 = jax.random.normal(k4, (N1, 1, H, W), dtype=jnp.float32)
    gt1 = (jax.random.uniform(k2, (N1, H, W)) > 0.5).astype(jnp.float32)
    inst1 = [Instances(pred_classes=jnp.zeros((N1,), jnp.int32),
                       gt_classes=jnp.zeros((N1,), jnp.int32), gt_masks=gt1)]

    loss1 = jax.block_until_ready(head_train(x1, inst1)['loss_mask'])
    sel1 = x1[:, 0]
    ref_loss1 = jnp.mean(jnp.maximum(sel1, 0.0) - sel1 * gt1
                         + jnp.log1p(jnp.exp(-jnp.abs(sel1))))
    np.testing.assert_allclose(np.asarray(loss1), np.asarray(ref_loss1), rtol=1e-5, atol=1e-5)

    out1 = head_eval(x1, inst1)
    probs1 = jax.block_until_ready(out1[0].pred_masks)
    np.testing.assert_allclose(np.asarray(probs1),
                               np.asarray(jax.nn.sigmoid(sel1)[:, None]),
                               rtol=1e-5, atol=1e-5)

    print("KERNEL_OK")
</pallas_src>

<mosaic_0001>
module attributes {stable_mosaic.version = 11 : i64} {
  func.func @_bce_gather_kernel(%arg0: i32, %arg1: i32, %arg2: memref<8xi32, #tpu.memory_space<smem>>, %arg3: memref<8x4x256xf32, #tpu.memory_space<any>>, %arg4: memref<8x256xf32, #tpu.memory_space<vmem>>, %arg5: memref<1x1x256xf32, #tpu.memory_space<vmem>>, %arg6: memref<2x8x256xf32, #tpu.memory_space<vmem>>, %arg7: memref<2x8x!tpu.dma_semaphore, #tpu.memory_space<semaphore_mem>>) attributes {dimension_semantics = [#tpu.dimension_semantics<parallel>, #tpu.dimension_semantics<arbitrary>], iteration_bounds = array<i64: 1, 1>, scalar_prefetch = 1 : i64, scratch_operands = 2 : i64, tpu.core_type = #tpu.core_type<tc>, window_params = [{}, {transform_indices = @transform_1, window_bounds = array<i64: 8, 256>}, {transform_indices = @transform_2, window_bounds = array<i64: 1, 1, 256>}]} {
    %c1_i32 = arith.constant 1 : i32
    %0 = arith.muli %arg0, %c1_i32 : i32
    %1 = arith.addi %0, %arg1 : i32
    %c0_i32 = arith.constant 0 : i32
    %2 = arith.cmpi eq, %arg1, %c0_i32 : i32
    %3 = arith.extui %2 : i1 to i32
    %c0_i32_0 = arith.constant 0 : i32
    %4 = arith.cmpi ne, %3, %c0_i32_0 : i32
    scf.if %4 {
      %c8_i32 = arith.constant 8 : i32
      %90 = arith.muli %1, %c8_i32 : i32
      %c0_i32_65 = arith.constant 0 : i32
      %91 = arith.addi %90, %c0_i32_65 : i32
      %c7_i32_66 = arith.constant 7 : i32
      %92 = arith.minsi %91, %c7_i32_66 : i32
      %93 = arith.index_cast %92 : i32 to index
      %94 = memref.load %arg2[%93] : memref<8xi32, #tpu.memory_space<smem>>
      %c0_i32_67 = arith.constant 0 : i32
      %c0_i32_68 = arith.constant 0 : i32
      %c0_i32_69 = arith.constant 0 : i32
      %c0_i32_70 = arith.constant 0 : i32
      %95 = tpu.memref_slice %arg3[%92, %94, %c0_i32_70] : memref<8x4x256xf32, #tpu.memory_space<any>> -> memref<1x1x256xf32, #tpu.memory_space<any>>
      %96 = tpu.memref_squeeze %95 : memref<1x1x256xf32, #tpu.memory_space<any>> -> memref<1x256xf32, #tpu.memory_space<any>>
      %c0_i32_71 = arith.constant 0 : i32
      %c0_i32_72 = arith.constant 0 : i32
      %97 = tpu.memref_slice %arg6[%c0_i32_67, %c0_i32_71, %c0_i32_72] : memref<2x8x256xf32, #tpu.memory_space<vmem>> -> memref<1x1x256xf32, #tpu.memory_space<vmem>>
      %98 = tpu.memref_squeeze %97 : memref<1x1x256xf32, #tpu.memory_space<vmem>> -> memref<1x256xf32, #tpu.memory_space<vmem>>
      %99 = tpu.memref_slice %arg7[%c0_i32_68, %c0_i32_69] : memref<2x8x!tpu.dma_semaphore, #tpu.memory_space<semaphore_mem>> -> memref<1x1x!tpu.dma_semaphore, #tpu.memory_space<semaphore_mem>>
      %100 = tpu.memref_squeeze %99 : memref<1x1x!tpu.dma_semaphore, #tpu.memory_space<semaphore_mem>> -> memref<!tpu.dma_semaphore, #tpu.memory_space<semaphore_mem>>
      tpu.enqueue_dma source(%96 : memref<1x256xf32, #tpu.memory_space<any>>) target(%98 : memref<1x256xf32, #tpu.memory_space<vmem>>) target_semaphore(%100 : memref<!tpu.dma_semaphore, #tpu.memory_space<semaphore_mem>>)
      %c8_i32_73 = arith.constant 8 : i32
      %101 = arith.muli %1, %c8_i32_73 : i32
      %c1_i32_74 = arith.constant 1 : i32
      %102 = arith.addi %101, %c1_i32_74 : i32
      %c7_i32_75 = arith.constant 7 : i32
      %103 = arith.minsi %102, %c7_i32_75 : i32
      %104 = arith.index_cast %103 : i32 to index
      %105 = memref.load %arg2[%104] : memref<8xi32, #tpu.memory_space<smem>>
      %c0_i32_76 = arith.constant 0 : i32
      %c0_i32_77 = arith.constant 0 : i32
      %c1_i32_78 = arith.constant 1 : i32
      %c0_i32_79 = arith.constant 0 : i32
      %106 = tpu.memref_slice %arg3[%103, %105, %c0_i32_79] : memref<8x4x256xf32, #tpu.memory_space<any>> -> memref<1x1x256xf32, #tpu.memory_space<any>>
      %107 = tpu.memref_squeeze %106 : memref<1x1x256xf32, #tpu.memory_space<any>> -> memref<1x256xf32, #tpu.memory_space<any>>
      %c1_i32_80 = arith.constant 1 : i32
      %c0_i32_81 = arith.constant 0 : i32
      %108 = tpu.memref_slice %arg6[%c0_i32_76, %c1_i32_80, %c0_i32_81] : memref<2x8x256xf32, #tpu.memory_space<vmem>> -> memref<1x1x256xf32, #tpu.memory_space<vmem>>
      %109 = tpu.memref_squeeze %108 : memref<1x1x256xf32, #tpu.memory_space<vmem>> -> memref<1x256xf32, #tpu.memory_space<vmem>>
      %110 = tpu.memref_slice %arg7[%c0_i32_77, %c1_i32_78] : memref<2x8x!tpu.dma_semaphore, #tpu.memory_space<semaphore_mem>> -> memref<1x1x!tpu.dma_semaphore, #tpu.memory_space<semaphore_mem>>
      %111 = tpu.memref_squeeze %110 : memref<1x1x!tpu.dma_semaphore, #tpu.memory_space<semaphore_mem>> -> memref<!tpu.dma_semaphore, #tpu.memory_space<semaphore_mem>>
      tpu.enqueue_dma source(%107 : memref<1x256xf32, #tpu.memory_space<any>>) target(%109 : memref<1x256xf32, #tpu.memory_space<vmem>>) target_semaphore(%111 : memref<!tpu.dma_semaphore, #tpu.memory_space<semaphore_mem>>)
      %c8_i32_82 = arith.constant 8 : i32
      %112 = arith.muli %1, %c8_i32_82 : i32
      %c2_i32_83 = arith.constant 2 : i32
      %113 = arith.addi %112, %c2_i32_83 : i32
      %c7_i32_84 = arith.constant 7 : i32
      %114 = arith.minsi %113, %c7_i32_84 : i32
      %115 = arith.index_cast %114 : i32 to index
      %116 = memref.load %arg2[%115] : memref<8xi32, #tpu.memory_space<smem>>
      %c0_i32_85 = arith.constant 0 : i32
      %c0_i32_86 = arith.constant 0 : i32
      %c2_i32_87 = arith.constant 2 : i32
      %c0_i32_88 = arith.constant 0 : i32
      %117 = tpu.memref_slice %arg3[%114, %116, %c0_i32_88] : memref<8x4x256xf32, #tpu.memory_space<any>> -> memref<1x1x256xf32, #tpu.memory_space<any>>
      %118 = tpu.memref_squeeze %117 : memref<1x1x256xf32, #tpu.memory_space<any>> -> memref<1x256xf32, #tpu.memory_space<any>>
      %c2_i32_89 = arith.constant 2 : i32
      %c0_i32_90 = arith.constant 0 : i32
      %119 = tpu.memref_slice %arg6[%c0_i32_85, %c2_i32_89, %c0_i32_90] : memref<2x8x256xf32, #tpu.memory_space<vmem>> -> memref<1x1x256xf32, #tpu.memory_space<vmem>>
      %120 = tpu.memref_squeeze %119 : memref<1x1x256xf32, #tpu.memory_space<vmem>> -> memref<1x256xf32, #tpu.memory_space<vmem>>
      %121 = tpu.memref_slice %arg7[%c0_i32_86, %c2_i32_87] : memref<2x8x!tpu.dma_semaphore, #tpu.memory_space<semaphore_mem>> -> memref<1x1x!tpu.dma_semaphore, #tpu.memory_space<semaphore_mem>>
      %122 = tpu.memref_squeeze %121 : memref<1x1x!tpu.dma_semaphore, #tpu.memory_space<semaphore_mem>> -> memref<!tpu.dma_semaphore, #tpu.memory_space<semaphore_mem>>
      tpu.enqueue_dma source(%118 : memref<1x256xf32, #tpu.memory_space<any>>) target(%120 : memref<1x256xf32, #tpu.memory_space<vmem>>) target_semaphore(%122 : memref<!tpu.dma_semaphore, #tpu.memory_space<semaphore_mem>>)
      %c8_i32_91 = arith.constant 8 : i32
      %123 = arith.muli %1, %c8_i32_91 : i32
      %c3_i32_92 = arith.constant 3 : i32
      %124 = arith.addi %123, %c3_i32_92 : i32
      %c7_i32_93 = arith.constant 7 : i32
      %125 = arith.minsi %124, %c7_i32_93 : i32
      %126 = arith.index_cast %125 : i32 to index
      %127 = memref.load %arg2[%126] : memref<8xi32, #tpu.memory_space<smem>>
      %c0_i32_94 = arith.constant 0 : i32
      %c0_i32_95 = arith.constant 0 : i32
      %c3_i32_96 = arith.constant 3 : i32
      %c0_i32_97 = arith.constant 0 : i32
      %128 = tpu.memref_slice %arg3[%125, %127, %c0_i32_97] : memref<8x4x256xf32, #tpu.memory_space<any>> -> memref<1x1x256xf32, #tpu.memory_space<any>>
      %129 = tpu.memref_squeeze %128 : memref<1x1x256xf32, #tpu.memory_space<any>> -> memref<1x256xf32, #tpu.memory_space<any>>
      %c3_i32_98 = arith.constant 3 : i32
      %c0_i32_99 = arith.constant 0 : i32
      %130 = tpu.memref_slice %arg6[%c0_i32_94, %c3_i32_98, %c0_i32_99] : memref<2x8x256xf32, #tpu.memory_space<vmem>> -> memref<1x1x256xf32, #tpu.memory_space<vmem>>
      %131 = tpu.memref_squeeze %130 : memref<1x1x256xf32, #tpu.memory_space<vmem>> -> memref<1x256xf32, #tpu.memory_space<vmem>>
      %132 = tpu.memref_slice %arg7[%c0_i32_95, %c3_i32_96] : memref<2x8x!tpu.dma_semaphore, #tpu.memory_space<semaphore_mem>> -> memref<1x1x!tpu.dma_semaphore, #tpu.memory_space<semaphore_mem>>
      %133 = tpu.memref_squeeze %132 : memref<1x1x!tpu.dma_semaphore, #tpu.memory_space<semaphore_mem>> -> memref<!tpu.dma_semaphore, #tpu.memory_space<semaphore_mem>>
      tpu.enqueue_dma source(%129 : memref<1x256xf32, #tpu.memory_space<any>>) target(%131 : memref<1x256xf32, #tpu.memory_space<vmem>>) target_semaphore(%133 : memref<!tpu.dma_semaphore, #tpu.memory_space<semaphore_mem>>)
      %c8_i32_100 = arith.constant 8 : i32
      %134 = arith.muli %1, %c8_i32_100 : i32
      %c4_i32_101 = arith.constant 4 : i32
      %135 = arith.addi %134, %c4_i32_101 : i32
      %c7_i32_102 = arith.constant 7 : i32
      %136 = arith.minsi %135, %c7_i32_102 : i32
      %137 = arith.index_cast %136 : i32 to index
      %138 = memref.load %arg2[%137] : memref<8xi32, #tpu.memory_space<smem>>
      %c0_i32_103 = arith.constant 0 : i32
      %c0_i32_104 = arith.constant 0 : i32
      %c4_i32_105 = arith.constant 4 : i32
      %c0_i32_106 = arith.constant 0 : i32
      %139 = tpu.memref_slice %arg3[%136, %138, %c0_i32_106] : memref<8x4x256xf32, #tpu.memory_space<any>> -> memref<1x1x256xf32, #tpu.memory_space<any>>
      %140 = tpu.memref_squeeze %139 : memref<1x1x256xf32, #tpu.memory_space<any>> -> memref<1x256xf32, #tpu.memory_space<any>>
      %c4_i32_107 = arith.constant 4 : i32
      %c0_i32_108 = arith.constant 0 : i32
      %141 = tpu.memref_slice %arg6[%c0_i32_103, %c4_i32_107, %c0_i32_108] : memref<2x8x256xf32, #tpu.memory_space<vmem>> -> memref<1x1x256xf32, #tpu.memory_space<vmem>>
      %142 = tpu.memref_squeeze %141 : memref<1x1x256xf32, #tpu.memory_space<vmem>> -> memref<1x256xf32, #tpu.memory_space<vmem>>
      %143 = tpu.memref_slice %arg7[%c0_i32_104, %c4_i32_105] : memref<2x8x!tpu.dma_semaphore, #tpu.memory_space<semaphore_mem>> -> memref<1x1x!tpu.dma_semaphore, #tpu.memory_space<semaphore_mem>>
      %144 = tpu.memref_squeeze %143 : memref<1x1x!tpu.dma_semaphore, #tpu.memory_space<semaphore_mem>> -> memref<!tpu.dma_semaphore, #tpu.memory_space<semaphore_mem>>
      tpu.enqueue_dma source(%140 : memref<1x256xf32, #tpu.memory_space<any>>) target(%142 : memref<1x256xf32, #tpu.memory_space<vmem>>) target_semaphore(%144 : memref<!tpu.dma_semaphore, #tpu.memory_space<semaphore_mem>>)
      %c8_i32_109 = arith.constant 8 : i32
      %145 = arith.muli %1, %c8_i32_109 : i32
      %c5_i32_110 = arith.constant 5 : i32
      %146 = arith.addi %145, %c5_i32_110 : i32
      %c7_i32_111 = arith.constant 7 : i32
      %147 = arith.minsi %146, %c7_i32_111 : i32
      %148 = arith.index_cast %147 : i32 to index
      %149 = memref.load %arg2[%148] : memref<8xi32, #tpu.memory_space<smem>>
      %c0_i32_112 = arith.constant 0 : i32
      %c0_i32_113 = arith.constant 0 : i32
      %c5_i32_114 = arith.constant 5 : i32
      %c0_i32_115 = arith.constant 0 : i32
      %150 = tpu.memref_slice %arg3[%147, %149, %c0_i32_115] : memref<8x4x256xf32, #tpu.memory_space<any>> -> memref<1x1x256xf32, #tpu.memory_space<any>>
      %151 = tpu.memref_squeeze %150 : memref<1x1x256xf32, #tpu.memory_space<any>> -> memref<1x256xf32, #tpu.memory_space<any>>
      %c5_i32_116 = arith.constant 5 : i32
      %c0_i32_117 = arith.constant 0 : i32
      %152 = tpu.memref_slice %arg6[%c0_i32_112, %c5_i32_116, %c0_i32_117] : memref<2x8x256xf32, #tpu.memory_space<vmem>> -> memref<1x1x256xf32, #tpu.memory_space<vmem>>
      %153 = tpu.memref_squeeze %152 : memref<1x1x256xf32, #tpu.memory_space<vmem>> -> memref<1x256xf32, #tpu.memory_space<vmem>>
      %154 = tpu.memref_slice %arg7[%c0_i32_113, %c5_i32_114] : memref<2x8x!tpu.dma_semaphore, #tpu.memory_space<semaphore_mem>> -> memref<1x1x!tpu.dma_semaphore, #tpu.memory_space<semaphore_mem>>
      %155 = tpu.memref_squeeze %154 : memref<1x1x!tpu.dma_semaphore, #tpu.memory_space<semaphore_mem>> -> memref<!tpu.dma_semaphore, #tpu.memory_space<semaphore_mem>>
      tpu.enqueue_dma source(%151 : memref<1x256xf32, #tpu.memory_space<any>>) target(%153 : memref<1x256xf32, #tpu.memory_space<vmem>>) target_semaphore(%155 : memref<!tpu.dma_semaphore, #tpu.memory_space<semaphore_mem>>)
      %c8_i32_118 = arith.constant 8 : i32
      %156 = arith.muli %1, %c8_i32_118 : i32
      %c6_i32_119 = arith.constant 6 : i32
      %157 = arith.addi %156, %c6_i32_119 : i32
      %c7_i32_120 = arith.constant 7 : i32
      %158 = arith.minsi %157, %c7_i32_120 : i32
      %159 = arith.index_cast %158 : i32 to index
      %160 = memref.load %arg2[%159] : memref<8xi32, #tpu.memory_space<smem>>
      %c0_i32_121 = arith.constant 0 : i32
      %c0_i32_122 = arith.constant 0 : i32
      %c6_i32_123 = arith.constant 6 : i32
      %c0_i32_124 = arith.constant 0 : i32
      %161 = tpu.memref_slice %arg3[%158, %160, %c0_i32_124] : memref<8x4x256xf32, #tpu.memory_space<any>> -> memref<1x1x256xf32, #tpu.memory_space<any>>
      %162 = tpu.memref_squeeze %161 : memref<1x1x256xf32, #tpu.memory_space<any>> -> memref<1x256xf32, #tpu.memory_space<any>>
      %c6_i32_125 = arith.constant 6 : i32
      %c0_i32_126 = arith.constant 0 : i32
      %163 = tpu.memref_slice %arg6[%c0_i32_121, %c6_i32_125, %c0_i32_126] : memref<2x8x256xf32, #tpu.memory_space<vmem>> -> memref<1x1x256xf32, #tpu.memory_space<vmem>>
      %164 = tpu.memref_squeeze %163 : memref<1x1x256xf32, #tpu.memory_space<vmem>> -> memref<1x256xf32, #tpu.memory_space<vmem>>
      %165 = tpu.memref_slice %arg7[%c0_i32_122, %c6_i32_123] : memref<2x8x!tpu.dma_semaphore, #tpu.memory_space<semaphore_mem>> -> memref<1x1x!tpu.dma_semaphore, #tpu.memory_space<semaphore_mem>>
      %166 = tpu.memref_squeeze %165 : memref<1x1x!tpu.dma_semaphore, #tpu.memory_space<semaphore_mem>> -> memref<!tpu.dma_semaphore, #tpu.memory_space<semaphore_mem>>
      tpu.enqueue_dma source(%162 : memref<1x256xf32, #tpu.memory_space<any>>) target(%164 : memref<1x256xf32, #tpu.memory_space<vmem>>) target_semaphore(%166 : memref<!tpu.dma_semaphore, #tpu.memory_space<semaphore_mem>>)
      %c8_i32_127 = arith.constant 8 : i32
      %167 = arith.muli %1, %c8_i32_127 : i32
      %c7_i32_128 = arith.constant 7 : i32
      %168 = arith.addi %167, %c7_i32_128 : i32
      %c7_i32_129 = arith.constant 7 : i32
      %169 = arith.minsi %168, %c7_i32_129 : i32
      %170 = arith.index_cast %169 : i32 to index
      %171 = memref.load %arg2[%170] : memref<8xi32, #tpu.memory_space<smem>>
      %c0_i32_130 = arith.constant 0 : i32
      %c0_i32_131 = arith.constant 0 : i32
      %c7_i32_132 = arith.constant 7 : i32
      %c0_i32_133 = arith.constant 0 : i32
      %172 = tpu.memref_slice %arg3[%169, %171, %c0_i32_133] : memref<8x4x256xf32, #tpu.memory_space<any>> -> memref<1x1x256xf32, #tpu.memory_space<any>>
      %173 = tpu.memref_squeeze %172 : memref<1x1x256xf32, #tpu.memory_space<any>> -> memref<1x256xf32, #tpu.memory_space<any>>
      %c7_i32_134 = arith.constant 7 : i32
      %c0_i32_135 = arith.constant 0 : i32
      %174 = tpu.memref_slice %arg6[%c0_i32_130, %c7_i32_134, %c0_i32_135] : memref<2x8x256xf32, #tpu.memory_space<vmem>> -> memref<1x1x256xf32, #tpu.memory_space<vmem>>
      %175 = tpu.memref_squeeze %174 : memref<1x1x256xf32, #tpu.memory_space<vmem>> -> memref<1x256xf32, #tpu.memory_space<vmem>>
      %176 = tpu.memref_slice %arg7[%c0_i32_131, %c7_i32_132] : memref<2x8x!tpu.dma_semaphore, #tpu.memory_space<semaphore_mem>> -> memref<1x1x!tpu.dma_semaphore, #tpu.memory_space<semaphore_mem>>
      %177 = tpu.memref_squeeze %176 : memref<1x1x!tpu.dma_semaphore, #tpu.memory_space<semaphore_mem>> -> memref<!tpu.dma_semaphore, #tpu.memory_space<semaphore_mem>>
      tpu.enqueue_dma source(%173 : memref<1x256xf32, #tpu.memory_space<any>>) target(%175 : memref<1x256xf32, #tpu.memory_space<vmem>>) target_semaphore(%177 : memref<!tpu.dma_semaphore, #tpu.memory_space<semaphore_mem>>)
    } else {
    }
    %c1_i32_1 = arith.constant 1 : i32
    %5 = arith.addi %arg1, %c1_i32_1 : i32
    %c1_i32_2 = arith.constant 1 : i32
    %6 = arith.cmpi slt, %5, %c1_i32_2 : i32
    %7 = arith.extui %6 : i1 to i32
    %c0_i32_3 = arith.constant 0 : i32
    %8 = arith.cmpi ne, %7, %c0_i32_3 : i32
    scf.if %8 {
      %c1_i32_65 = arith.constant 1 : i32
      %90 = arith.addi %1, %c1_i32_65 : i32
      %c1_i32_66 = arith.constant 1 : i32
      %91 = arith.addi %arg1, %c1_i32_66 : i32
      %c2_i32_67 = arith.constant 2 : i32
      %c0_i32_68 = arith.constant 0 : i32
      %92 = arith.cmpi eq, %c2_i32_67, %c0_i32_68 : i32
      %c1_i32_69 = arith.constant 1 : i32
      %93 = arith.select %92, %c1_i32_69, %c2_i32_67 : i32
      %94 = arith.remsi %91, %93 : i32
      %c0_i32_70 = arith.constant 0 : i32
      %95 = arith.cmpi ne, %94, %c0_i32_70 : i32
      %c0_i32_71 = arith.constant 0 : i32
      %96 = arith.cmpi slt, %94, %c0_i32_71 : i32
      %c0_i32_72 = arith.constant 0 : i32
      %97 = arith.cmpi slt, %93, %c0_i32_72 : i32
      %98 = arith.xori %96, %97 : i1
      %99 = arith.andi %98, %95 : i1
      %100 = arith.addi %94, %93 : i32
      %101 = arith.select %99, %100, %94 : i32
      %c8_i32 = arith.constant 8 : i32
      %102 = arith.muli %90, %c8_i32 : i32
      %c0_i32_73 = arith.constant 0 : i32
      %103 = arith.addi %102, %c0_i32_73 : i32
      %c7_i32_74 = arith.constant 7 : i32
      %104 = arith.minsi %103, %c7_i32_74 : i32
      %105 = arith.index_cast %104 : i32 to index
      %106 = memref.load %arg2[%105] : memref<8xi32, #tpu.memory_space<smem>>
      %c0_i32_75 = arith.constant 0 : i32
      %c0_i32_76 = arith.constant 0 : i32
      %107 = tpu.memref_slice %arg3[%104, %106, %c0_i32_76] : memref<8x4x256xf32, #tpu.memory_space<any>> -> memref<1x1x256xf32, #tpu.memory_space<any>>
      %108 = tpu.memref_squeeze %107 : memref<1x1x256xf32, #tpu.memory_space<any>> -> memref<1x256xf32, #tpu.memory_space<any>>
      %c0_i32_77 = arith.constant 0 : i32
      %c0_i32_78 = arith.constant 0 : i32
      %109 = tpu.memref_slice %arg6[%101, %c0_i32_77, %c0_i32_78] : memref<2x8x256xf32, #tpu.memory_space<vmem>> -> memref<1x1x256xf32, #tpu.memory_space<vmem>>
      %110 = tpu.memref_squeeze %109 : memref<1x1x256xf32, #tpu.memory_space<vmem>> -> memref<1x256xf32, #tpu.memory_space<vmem>>
      %111 = tpu.memref_slice %arg7[%101, %c0_i32_75] : memref<2x8x!tpu.dma_semaphore, #tpu.memory_space<semaphore_mem>> -> memref<1x1x!tpu.dma_semaphore, #tpu.memory_space<semaphore_mem>>
      %112 = tpu.memref_squeeze %111 : memref<1x1x!tpu.dma_semaphore, #tpu.memory_space<semaphore_mem>> -> memref<!tpu.dma_semaphore, #tpu.memory_space<semaphore_mem>>
      tpu.enqueue_dma source(%108 : memref<1x256xf32, #tpu.memory_space<any>>) target(%110 : memref<1x256xf32, #tpu.memory_space<vmem>>) target_semaphore(%112 : memref<!tpu.dma_semaphore, #tpu.memory_space<semaphore_mem>>)
      %c8_i32_79 = arith.constant 8 : i32
      %113 = arith.muli %90, %c8_i32_79 : i32
      %c1_i32_80 = arith.constant 1 : i32
      %114 = arith.addi %113, %c1_i32_80 : i32
      %c7_i32_81 = arith.constant 7 : i32
      %115 = arith.minsi %114, %c7_i32_81 : i32
      %116 = arith.index_cast %115 : i32 to index
      %117 = memref.load %arg2[%116] : memref<8xi32, #tpu.memory_space<smem>>
      %c1_i32_82 = arith.constant 1 : i32
      %c0_i32_83 = arith.constant 0 : i32
      %118 = tpu.memref_slice %arg3[%115, %117, %c0_i32_83] : memref<8x4x256xf32, #tpu.memory_space<any>> -> memref<1x1x256xf32, #tpu.memory_space<any>>
      %119 = tpu.memref_squeeze %118 : memref<1x1x256xf32, #tpu.memory_space<any>> -> memref<1x256xf32, #tpu.memory_space<any>>
      %c1_i32_84 = arith.constant 1 : i32
      %c0_i32_85 = arith.constant 0 : i32
      %120 = tpu.memref_slice %arg6[%101, %c1_i32_84, %c0_i32_85] : memref<2x8x256xf32, #tpu.memory_space<vmem>> -> memref<1x1x256xf32, #tpu.memory_space<vmem>>
      %121 = tpu.memref_squeeze %120 : memref<1x1x256xf32, #tpu.memory_space<vmem>> -> memref<1x256xf32, #tpu.memory_space<vmem>>
      %122 = tpu.memref_slice %arg7[%101, %c1_i32_82] : memref<2x8x!tpu.dma_semaphore, #tpu.memory_space<semaphore_mem>> -> memref<1x1x!tpu.dma_semaphore, #tpu.memory_space<semaphore_mem>>
      %123 = tpu.memref_squeeze %122 : memref<1x1x!tpu.dma_semaphore, #tpu.memory_space<semaphore_mem>> -> memref<!tpu.dma_semaphore, #tpu.memory_space<semaphore_mem>>
      tpu.enqueue_dma source(%119 : memref<1x256xf32, #tpu.memory_space<any>>) target(%121 : memref<1x256xf32, #tpu.memory_space<vmem>>) target_semaphore(%123 : memref<!tpu.dma_semaphore, #tpu.memory_space<semaphore_mem>>)
      %c8_i32_86 = arith.constant 8 : i32
      %124 = arith.muli %90, %c8_i32_86 : i32
      %c2_i32_87 = arith.constant 2 : i32
      %125 = arith.addi %124, %c2_i32_87 : i32
      %c7_i32_88 = arith.constant 7 : i32
      %126 = arith.minsi %125, %c7_i32_88 : i32
      %127 = arith.index_cast %126 : i32 to index
      %128 = memref.load %arg2[%127] : memref<8xi32, #tpu.memory_space<smem>>
      %c2_i32_89 = arith.constant 2 : i32
      %c0_i32_90 = arith.constant 0 : i32
      %129 = tpu.memref_slice %arg3[%126, %128, %c0_i32_90] : memref<8x4x256xf32, #tpu.memory_space<any>> -> memref<1x1x256xf32, #tpu.memory_space<any>>
      %130 = tpu.memref_squeeze %129 : memref<1x1x256xf32, #tpu.memory_space<any>> -> memref<1x256xf32, #tpu.memory_space<any>>
      %c2_i32_91 = arith.constant 2 : i32
      %c0_i32_92 = arith.constant 0 : i32
      %131 = tpu.memref_slice %arg6[%101, %c2_i32_91, %c0_i32_92] : memref<2x8x256xf32, #tpu.memory_space<vmem>> -> memref<1x1x256xf32, #tpu.memory_space<vmem>>
      %132 = tpu.memref_squeeze %131 : memref<1x1x256xf32, #tpu.memory_space<vmem>> -> memref<1x256xf32, #tpu.memory_space<vmem>>
      %133 = tpu.memref_slice %arg7[%101, %c2_i32_89] : memref<2x8x!tpu.dma_semaphore, #tpu.memory_space<semaphore_mem>> -> memref<1x1x!tpu.dma_semaphore, #tpu.memory_space<semaphore_mem>>
      %134 = tpu.memref_squeeze %133 : memref<1x1x!tpu.dma_semaphore, #tpu.memory_space<semaphore_mem>> -> memref<!tpu.dma_semaphore, #tpu.memory_space<semaphore_mem>>
      tpu.enqueue_dma source(%130 : memref<1x256xf32, #tpu.memory_space<any>>) target(%132 : memref<1x256xf32, #tpu.memory_space<vmem>>) target_semaphore(%134 : memref<!tpu.dma_semaphore, #tpu.memory_space<semaphore_mem>>)
      %c8_i32_93 = arith.constant 8 : i32
      %135 = arith.muli %90, %c8_i32_93 : i32
      %c3_i32_94 = arith.constant 3 : i32
      %136 = arith.addi %135, %c3_i32_94 : i32
      %c7_i32_95 = arith.constant 7 : i32
      %137 = arith.minsi %136, %c7_i32_95 : i32
      %138 = arith.index_cast %137 : i32 to index
      %139 = memref.load %arg2[%138] : memref<8xi32, #tpu.memory_space<smem>>
      %c3_i32_96 = arith.constant 3 : i32
      %c0_i32_97 = arith.constant 0 : i32
      %140 = tpu.memref_slice %arg3[%137, %139, %c0_i32_97] : memref<8x4x256xf32, #tpu.memory_space<any>> -> memref<1x1x256xf32, #tpu.memory_space<any>>
      %141 = tpu.memref_squeeze %140 : memref<1x1x256xf32, #tpu.memory_space<any>> -> memref<1x256xf32, #tpu.memory_space<any>>
      %c3_i32_98 = arith.constant 3 : i32
      %c0_i32_99 = arith.constant 0 : i32
      %142 = tpu.memref_slice %arg6[%101, %c3_i32_98, %c0_i32_99] : memref<2x8x256xf32, #tpu.memory_space<vmem>> -> memref<1x1x256xf32, #tpu.memory_space<vmem>>
      %143 = tpu.memref_squeeze %142 : memref<1x1x256xf32, #tpu.memory_space<vmem>> -> memref<1x256xf32, #tpu.memory_space<vmem>>
      %144 = tpu.memref_slice %arg7[%101, %c3_i32_96] : memref<2x8x!tpu.dma_semaphore, #tpu.memory_space<semaphore_mem>> -> memref<1x1x!tpu.dma_semaphore, #tpu.memory_space<semaphore_mem>>
      %145 = tpu.memref_squeeze %144 : memref<1x1x!tpu.dma_semaphore, #tpu.memory_space<semaphore_mem>> -> memref<!tpu.dma_semaphore, #tpu.memory_space<semaphore_mem>>
      tpu.enqueue_dma source(%141 : memref<1x256xf32, #tpu.memory_space<any>>) target(%143 : memref<1x256xf32, #tpu.memory_space<vmem>>) target_semaphore(%145 : memref<!tpu.dma_semaphore, #tpu.memory_space<semaphore_mem>>)
      %c8_i32_100 = arith.constant 8 : i32
      %146 = arith.muli %90, %c8_i32_100 : i32
      %c4_i32_101 = arith.constant 4 : i32
      %147 = arith.addi %146, %c4_i32_101 : i32
      %c7_i32_102 = arith.constant 7 : i32
      %148 = arith.minsi %147, %c7_i32_102 : i32
      %149 = arith.index_cast %148 : i32 to index
      %150 = memref.load %arg2[%149] : memref<8xi32, #tpu.memory_space<smem>>
      %c4_i32_103 = arith.constant 4 : i32
      %c0_i32_104 = arith.constant 0 : i32
      %151 = tpu.memref_slice %arg3[%148, %150, %c0_i32_104] : memref<8x4x256xf32, #tpu.memory_space<any>> -> memref<1x1x256xf32, #tpu.memory_space<any>>
      %152 = tpu.memref_squeeze %151 : memref<1x1x256xf32, #tpu.memory_space<any>> -> memref<1x256xf32, #tpu.memory_space<any>>
      %c4_i32_105 = arith.constant 4 : i32
      %c0_i32_106 = arith.constant 0 : i32
      %153 = tpu.memref_slice %arg6[%101, %c4_i32_105, %c0_i32_106] : memref<2x8x256xf32, #tpu.memory_space<vmem>> -> memref<1x1x256xf32, #tpu.memory_space<vmem>>
      %154 = tpu.memref_squeeze %153 : memref<1x1x256xf32, #tpu.memory_space<vmem>> -> memref<1x256xf32, #tpu.memory_space<vmem>>
      %155 = tpu.memref_slice %arg7[%101, %c4_i32_103] : memref<2x8x!tpu.dma_semaphore, #tpu.memory_space<semaphore_mem>> -> memref<1x1x!tpu.dma_semaphore, #tpu.memory_space<semaphore_mem>>
      %156 = tpu.memref_squeeze %155 : memref<1x1x!tpu.dma_semaphore, #tpu.memory_space<semaphore_mem>> -> memref<!tpu.dma_semaphore, #tpu.memory_space<semaphore_mem>>
      tpu.enqueue_dma source(%152 : memref<1x256xf32, #tpu.memory_space<any>>) target(%154 : memref<1x256xf32, #tpu.memory_space<vmem>>) target_semaphore(%156 : memref<!tpu.dma_semaphore, #tpu.memory_space<semaphore_mem>>)
      %c8_i32_107 = arith.constant 8 : i32
      %157 = arith.muli %90, %c8_i32_107 : i32
      %c5_i32_108 = arith.constant 5 : i32
      %158 = arith.addi %157, %c5_i32_108 : i32
      %c7_i32_109 = arith.constant 7 : i32
      %159 = arith.minsi %158, %c7_i32_109 : i32
      %160 = arith.index_cast %159 : i32 to index
      %161 = memref.load %arg2[%160] : memref<8xi32, #tpu.memory_space<smem>>
      %c5_i32_110 = arith.constant 5 : i32
      %c0_i32_111 = arith.constant 0 : i32
      %162 = tpu.memref_slice %arg3[%159, %161, %c0_i32_111] : memref<8x4x256xf32, #tpu.memory_space<any>> -> memref<1x1x256xf32, #tpu.memory_space<any>>
      %163 = tpu.memref_squeeze %162 : memref<1x1x256xf32, #tpu.memory_space<any>> -> memref<1x256xf32, #tpu.memory_space<any>>
      %c5_i32_112 = arith.constant 5 : i32
      %c0_i32_113 = arith.constant 0 : i32
      %164 = tpu.memref_slice %arg6[%101, %c5_i32_112, %c0_i32_113] : memref<2x8x256xf32, #tpu.memory_space<vmem>> -> memref<1x1x256xf32, #tpu.memory_space<vmem>>
      %165 = tpu.memref_squeeze %164 : memref<1x1x256xf32, #tpu.memory_space<vmem>> -> memref<1x256xf32, #tpu.memory_space<vmem>>
      %166 = tpu.memref_slice %arg7[%101, %c5_i32_110] : memref<2x8x!tpu.dma_semaphore, #tpu.memory_space<semaphore_mem>> -> memref<1x1x!tpu.dma_semaphore, #tpu.memory_space<semaphore_mem>>
      %167 = tpu.memref_squeeze %166 : memref<1x1x!tpu.dma_semaphore, #tpu.memory_space<semaphore_mem>> -> memref<!tpu.dma_semaphore, #tpu.memory_space<semaphore_mem>>
      tpu.enqueue_dma source(%163 : memref<1x256xf32, #tpu.memory_space<any>>) target(%165 : memref<1x256xf32, #tpu.memory_space<vmem>>) target_semaphore(%167 : memref<!tpu.dma_semaphore, #tpu.memory_space<semaphore_mem>>)
      %c8_i32_114 = arith.constant 8 : i32
      %168 = arith.muli %90, %c8_i32_114 : i32
      %c6_i32_115 = arith.constant 6 : i32
      %169 = arith.addi %168, %c6_i32_115 : i32
      %c7_i32_116 = arith.constant 7 : i32
      %170 = arith.minsi %169, %c7_i32_116 : i32
      %171 = arith.index_cast %170 : i32 to index
      %172 = memref.load %arg2[%171] : memref<8xi32, #tpu.memory_space<smem>>
      %c6_i32_117 = arith.constant 6 : i32
      %c0_i32_118 = arith.constant 0 : i32
      %173 = tpu.memref_slice %arg3[%170, %172, %c0_i32_118] : memref<8x4x256xf32, #tpu.memory_space<any>> -> memref<1x1x256xf32, #tpu.memory_space<any>>
      %174 = tpu.memref_squeeze %173 : memref<1x1x256xf32, #tpu.memory_space<any>> -> memref<1x256xf32, #tpu.memory_space<any>>
      %c6_i32_119 = arith.constant 6 : i32
      %c0_i32_120 = arith.constant 0 : i32
      %175 = tpu.memref_slice %arg6[%101, %c6_i32_119, %c0_i32_120] : memref<2x8x256xf32, #tpu.memory_space<vmem>> -> memref<1x1x256xf32, #tpu.memory_space<vmem>>
      %176 = tpu.memref_squeeze %175 : memref<1x1x256xf32, #tpu.memory_space<vmem>> -> memref<1x256xf32, #tpu.memory_space<vmem>>
      %177 = tpu.memref_slice %arg7[%101, %c6_i32_117] : memref<2x8x!tpu.dma_semaphore, #tpu.memory_space<semaphore_mem>> -> memref<1x1x!tpu.dma_semaphore, #tpu.memory_space<semaphore_mem>>
      %178 = tpu.memref_squeeze %177 : memref<1x1x!tpu.dma_semaphore, #tpu.memory_space<semaphore_mem>> -> memref<!tpu.dma_semaphore, #tpu.memory_space<semaphore_mem>>
      tpu.enqueue_dma source(%174 : memref<1x256xf32, #tpu.memory_space<any>>) target(%176 : memref<1x256xf32, #tpu.memory_space<vmem>>) target_semaphore(%178 : memref<!tpu.dma_semaphore, #tpu.memory_space<semaphore_mem>>)
      %c8_i32_121 = arith.constant 8 : i32
      %179 = arith.muli %90, %c8_i32_121 : i32
      %c7_i32_122 = arith.constant 7 : i32
      %180 = arith.addi %179, %c7_i32_122 : i32
      %c7_i32_123 = arith.constant 7 : i32
      %181 = arith.minsi %180, %c7_i32_123 : i32
      %182 = arith.index_cast %181 : i32 to index
      %183 = memref.load %arg2[%182] : memref<8xi32, #tpu.memory_space<smem>>
      %c7_i32_124 = arith.constant 7 : i32
      %c0_i32_125 = arith.constant 0 : i32
      %184 = tpu.memref_slice %arg3[%181, %183, %c0_i32_125] : memref<8x4x256xf32, #tpu.memory_space<any>> -> memref<1x1x256xf32, #tpu.memory_space<any>>
      %185 = tpu.memref_squeeze %184 : memref<1x1x256xf32, #tpu.memory_space<any>> -> memref<1x256xf32, #tpu.memory_space<any>>
      %c7_i32_126 = arith.constant 7 : i32
      %c0_i32_127 = arith.constant 0 : i32
      %186 = tpu.memref_slice %arg6[%101, %c7_i32_126, %c0_i32_127] : memref<2x8x256xf32, #tpu.memory_space<vmem>> -> memref<1x1x256xf32, #tpu.memory_space<vmem>>
      %187 = tpu.memref_squeeze %186 : memref<1x1x256xf32, #tpu.memory_space<vmem>> -> memref<1x256xf32, #tpu.memory_space<vmem>>
      %188 = tpu.memref_slice %arg7[%101, %c7_i32_124] : memref<2x8x!tpu.dma_semaphore, #tpu.memory_space<semaphore_mem>> -> memref<1x1x!tpu.dma_semaphore, #tpu.memory_space<semaphore_mem>>
      %189 = tpu.memref_squeeze %188 : memref<1x1x!tpu.dma_semaphore, #tpu.memory_space<semaphore_mem>> -> memref<!tpu.dma_semaphore, #tpu.memory_space<semaphore_mem>>
      tpu.enqueue_dma source(%185 : memref<1x256xf32, #tpu.memory_space<any>>) target(%187 : memref<1x256xf32, #tpu.memory_space<vmem>>) target_semaphore(%189 : memref<!tpu.dma_semaphore, #tpu.memory_space<semaphore_mem>>)
    } else {
    }
    %c2_i32 = arith.constant 2 : i32
    %c0_i32_4 = arith.constant 0 : i32
    %9 = arith.cmpi eq, %c2_i32, %c0_i32_4 : i32
    %c1_i32_5 = arith.constant 1 : i32
    %10 = arith.select %9, %c1_i32_5, %c2_i32 : i32
    %11 = arith.remsi %arg1, %10 : i32
    %c0_i32_6 = arith.constant 0 : i32
    %12 = arith.cmpi ne, %11, %c0_i32_6 : i32
    %c0_i32_7 = arith.constant 0 : i32
    %13 = arith.cmpi slt, %11, %c0_i32_7 : i32
    %c0_i32_8 = arith.constant 0 : i32
    %14 = arith.cmpi slt, %10, %c0_i32_8 : i32
    %15 = arith.xori %13, %14 : i1
    %16 = arith.andi %15, %12 : i1
    %17 = arith.addi %11, %10 : i32
    %18 = arith.select %16, %17, %11 : i32
    %c0_i32_9 = arith.constant 0 : i32
    %c0_i32_10 = arith.constant 0 : i32
    %c0_i32_11 = arith.constant 0 : i32
    %c0_i32_12 = arith.constant 0 : i32
    %19 = tpu.memref_slice %arg3[%c0_i32_9, %c0_i32_11, %c0_i32_12] : memref<8x4x256xf32, #tpu.memory_space<any>> -> memref<1x1x256xf32, #tpu.memory_space<any>>
    %20 = tpu.memref_squeeze %19 : memref<1x1x256xf32, #tpu.memory_space<any>> -> memref<1x256xf32, #tpu.memory_space<any>>
    %c0_i32_13 = arith.constant 0 : i32
    %c0_i32_14 = arith.constant 0 : i32
    %21 = tpu.memref_slice %arg6[%18, %c0_i32_13, %c0_i32_14] : memref<2x8x256xf32, #tpu.memory_space<vmem>> -> memref<1x1x256xf32, #tpu.memory_space<vmem>>
    %22 = tpu.memref_squeeze %21 : memref<1x1x256xf32, #tpu.memory_space<vmem>> -> memref<1x256xf32, #tpu.memory_space<vmem>>
    %23 = tpu.memref_slice %arg7[%18, %c0_i32_10] : memref<2x8x!tpu.dma_semaphore, #tpu.memory_space<semaphore_mem>> -> memref<1x1x!tpu.dma_semaphore, #tpu.memory_space<semaphore_mem>>
    %24 = tpu.memref_squeeze %23 : memref<1x1x!tpu.dma_semaphore, #tpu.memory_space<semaphore_mem>> -> memref<!tpu.dma_semaphore, #tpu.memory_space<semaphore_mem>>
    tpu.wait_dma2 semaphore(%24 : memref<!tpu.dma_semaphore, #tpu.memory_space<semaphore_mem>>) src(%20 : memref<1x256xf32, #tpu.memory_space<any>>) dst(%22 : memref<1x256xf32, #tpu.memory_space<vmem>>)
    %c0_i32_15 = arith.constant 0 : i32
    %c1_i32_16 = arith.constant 1 : i32
    %c0_i32_17 = arith.constant 0 : i32
    %c0_i32_18 = arith.constant 0 : i32
    %25 = tpu.memref_slice %arg3[%c0_i32_15, %c0_i32_17, %c0_i32_18] : memref<8x4x256xf32, #tpu.memory_space<any>> -> memref<1x1x256xf32, #tpu.memory_space<any>>
    %26 = tpu.memref_squeeze %25 : memref<1x1x256xf32, #tpu.memory_space<any>> -> memref<1x256xf32, #tpu.memory_space<any>>
    %c1_i32_19 = arith.constant 1 : i32
    %c0_i32_20 = arith.constant 0 : i32
    %27 = tpu.memref_slice %arg6[%18, %c1_i32_19, %c0_i32_20] : memref<2x8x256xf32, #tpu.memory_space<vmem>> -> memref<1x1x256xf32, #tpu.memory_space<vmem>>
    %28 = tpu.memref_squeeze %27 : memref<1x1x256xf32, #tpu.memory_space<vmem>> -> memref<1x256xf32, #tpu.memory_space<vmem>>
    %29 = tpu.memref_slice %arg7[%18, %c1_i32_16] : memref<2x8x!tpu.dma_semaphore, #tpu.memory_space<semaphore_mem>> -> memref<1x1x!tpu.dma_semaphore, #tpu.memory_space<semaphore_mem>>
    %30 = tpu.memref_squeeze %29 : memref<1x1x!tpu.dma_semaphore, #tpu.memory_space<semaphore_mem>> -> memref<!tpu.dma_semaphore, #tpu.memory_space<semaphore_mem>>
    tpu.wait_dma2 semaphore(%30 : memref<!tpu.dma_semaphore, #tpu.memory_space<semaphore_mem>>) src(%26 : memref<1x256xf32, #tpu.memory_space<any>>) dst(%28 : memref<1x256xf32, #tpu.memory_space<vmem>>)
    %c0_i32_21 = arith.constant 0 : i32
    %c2_i32_22 = arith.constant 2 : i32
    %c0_i32_23 = arith.constant 0 : i32
    %c0_i32_24 = arith.constant 0 : i32
    %31 = tpu.memref_slice %arg3[%c0_i32_21, %c0_i32_23, %c0_i32_24] : memref<8x4x256xf32, #tpu.memory_space<any>> -> memref<1x1x256xf32, #tpu.memory_space<any>>
    %32 = tpu.memref_squeeze %31 : memref<1x1x256xf32, #tpu.memory_space<any>> -> memref<1x256xf32, #tpu.memory_space<any>>
    %c2_i32_25 = arith.constant 2 : i32
    %c0_i32_26 = arith.constant 0 : i32
    %33 = tpu.memref_slice %arg6[%18, %c2_i32_25, %c0_i32_26] : memref<2x8x256xf32, #tpu.memory_space<vmem>> -> memref<1x1x256xf32, #tpu.memory_space<vmem>>
    %34 = tpu.memref_squeeze %33 : memref<1x1x256xf32, #tpu.memory_space<vmem>> -> memref<1x256xf32, #tpu.memory_space<vmem>>
    %35 = tpu.memref_slice %arg7[%18, %c2_i32_22] : memref<2x8x!tpu.dma_semaphore, #tpu.memory_space<semaphore_mem>> -> memref<1x1x!tpu.dma_semaphore, #tpu.memory_space<semaphore_mem>>
    %36 = tpu.memref_squeeze %35 : memref<1x1x!tpu.dma_semaphore, #tpu.memory_space<semaphore_mem>> -> memref<!tpu.dma_semaphore, #tpu.memory_space<semaphore_mem>>
    tpu.wait_dma2 semaphore(%36 : memref<!tpu.dma_semaphore, #tpu.memory_space<semaphore_mem>>) src(%32 : memref<1x256xf32, #tpu.memory_space<any>>) dst(%34 : memref<1x256xf32, #tpu.memory_space<vmem>>)
    %c0_i32_27 = arith.constant 0 : i32
    %c3_i32 = arith.constant 3 : i32
    %c0_i32_28 = arith.constant 0 : i32
    %c0_i32_29 = arith.constant 0 : i32
    %37 = tpu.memref_slice %arg3[%c0_i32_27, %c0_i32_28, %c0_i32_29] : memref<8x4x256xf32, #tpu.memory_space<any>> -> memref<1x1x256xf32, #tpu.memory_space<any>>
    %38 = tpu.memref_squeeze %37 : memref<1x1x256xf32, #tpu.memory_space<any>> -> memref<1x256xf32, #tpu.memory_space<any>>
    %c3_i32_30 = arith.constant 3 : i32
    %c0_i32_31 = arith.constant 0 : i32
    %39 = tpu.memref_slice %arg6[%18, %c3_i32_30, %c0_i32_31] : memref<2x8x256xf32, #tpu.memory_space<vmem>> -> memref<1x1x256xf32, #tpu.memory_space<vmem>>
    %40 = tpu.memref_squeeze %39 : memref<1x1x256xf32, #tpu.memory_space<vmem>> -> memref<1x256xf32, #tpu.memory_space<vmem>>
    %41 = tpu.memref_slice %arg7[%18, %c3_i32] : memref<2x8x!tpu.dma_semaphore, #tpu.memory_space<semaphore_mem>> -> memref<1x1x!tpu.dma_semaphore, #tpu.memory_space<semaphore_mem>>
    %42 = tpu.memref_squeeze %41 : memref<1x1x!tpu.dma_semaphore, #tpu.memory_space<semaphore_mem>> -> memref<!tpu.dma_semaphore, #tpu.memory_space<semaphore_mem>>
    tpu.wait_dma2 semaphore(%42 : memref<!tpu.dma_semaphore, #tpu.memory_space<semaphore_mem>>) src(%38 : memref<1x256xf32, #tpu.memory_space<any>>) dst(%40 : memref<1x256xf32, #tpu.memory_space<vmem>>)
    %c0_i32_32 = arith.constant 0 : i32
    %c4_i32 = arith.constant 4 : i32
    %c0_i32_33 = arith.constant 0 : i32
    %c0_i32_34 = arith.constant 0 : i32
    %43 = tpu.memref_slice %arg3[%c0_i32_32, %c0_i32_33, %c0_i32_34] : memref<8x4x256xf32, #tpu.memory_space<any>> -> memref<1x1x256xf32, #tpu.memory_space<any>>
    %44 = tpu.memref_squeeze %43 : memref<1x1x256xf32, #tpu.memory_space<any>> -> memref<1x256xf32, #tpu.memory_space<any>>
    %c4_i32_35 = arith.constant 4 : i32
    %c0_i32_36 = arith.constant 0 : i32
    %45 = tpu.memref_slice %arg6[%18, %c4_i32_35, %c0_i32_36] : memref<2x8x256xf32, #tpu.memory_space<vmem>> -> memref<1x1x256xf32, #tpu.memory_space<vmem>>
    %46 = tpu.memref_squeeze %45 : memref<1x1x256xf32, #tpu.memory_space<vmem>> -> memref<1x256xf32, #tpu.memory_space<vmem>>
    %47 = tpu.memref_slice %arg7[%18, %c4_i32] : memref<2x8x!tpu.dma_semaphore, #tpu.memory_space<semaphore_mem>> -> memref<1x1x!tpu.dma_semaphore, #tpu.memory_space<semaphore_mem>>
    %48 = tpu.memref_squeeze %47 : memref<1x1x!tpu.dma_semaphore, #tpu.memory_space<semaphore_mem>> -> memref<!tpu.dma_semaphore, #tpu.memory_space<semaphore_mem>>
    tpu.wait_dma2 semaphore(%48 : memref<!tpu.dma_semaphore, #tpu.memory_space<semaphore_mem>>) src(%44 : memref<1x256xf32, #tpu.memory_space<any>>) dst(%46 : memref<1x256xf32, #tpu.memory_space<vmem>>)
    %c0_i32_37 = arith.constant 0 : i32
    %c5_i32 = arith.constant 5 : i32
    %c0_i32_38 = arith.constant 0 : i32
    %c0_i32_39 = arith.constant 0 : i32
    %49 = tpu.memref_slice %arg3[%c0_i32_37, %c0_i32_38, %c0_i32_39] : memref<8x4x256xf32, #tpu.memory_space<any>> -> memref<1x1x256xf32, #tpu.memory_space<any>>
    %50 = tpu.memref_squeeze %49 : memref<1x1x256xf32, #tpu.memory_space<any>> -> memref<1x256xf32, #tpu.memory_space<any>>
    %c5_i32_40 = arith.constant 5 : i32
    %c0_i32_41 = arith.constant 0 : i32
    %51 = tpu.memref_slice %arg6[%18, %c5_i32_40, %c0_i32_41] : memref<2x8x256xf32, #tpu.memory_space<vmem>> -> memref<1x1x256xf32, #tpu.memory_space<vmem>>
    %52 = tpu.memref_squeeze %51 : memref<1x1x256xf32, #tpu.memory_space<vmem>> -> memref<1x256xf32, #tpu.memory_space<vmem>>
    %53 = tpu.memref_slice %arg7[%18, %c5_i32] : memref<2x8x!tpu.dma_semaphore, #tpu.memory_space<semaphore_mem>> -> memref<1x1x!tpu.dma_semaphore, #tpu.memory_space<semaphore_mem>>
    %54 = tpu.memref_squeeze %53 : memref<1x1x!tpu.dma_semaphore, #tpu.memory_space<semaphore_mem>> -> memref<!tpu.dma_semaphore, #tpu.memory_space<semaphore_mem>>
    tpu.wait_dma2 semaphore(%54 : memref<!tpu.dma_semaphore, #tpu.memory_space<semaphore_mem>>) src(%50 : memref<1x256xf32, #tpu.memory_space<any>>) dst(%52 : memref<1x256xf32, #tpu.memory_space<vmem>>)
    %c0_i32_42 = arith.constant 0 : i32
    %c6_i32 = arith.constant 6 : i32
    %c0_i32_43 = arith.constant 0 : i32
    %c0_i32_44 = arith.constant 0 : i32
    %55 = tpu.memref_slice %arg3[%c0_i32_42, %c0_i32_43, %c0_i32_44] : memref<8x4x256xf32, #tpu.memory_space<any>> -> memref<1x1x256xf32, #tpu.memory_space<any>>
    %56 = tpu.memref_squeeze %55 : memref<1x1x256xf32, #tpu.memory_space<any>> -> memref<1x256xf32, #tpu.memory_space<any>>
    %c6_i32_45 = arith.constant 6 : i32
    %c0_i32_46 = arith.constant 0 : i32
    %57 = tpu.memref_slice %arg6[%18, %c6_i32_45, %c0_i32_46] : memref<2x8x256xf32, #tpu.memory_space<vmem>> -> memref<1x1x256xf32, #tpu.memory_space<vmem>>
    %58 = tpu.memref_squeeze %57 : memref<1x1x256xf32, #tpu.memory_space<vmem>> -> memref<1x256xf32, #tpu.memory_space<vmem>>
    %59 = tpu.memref_slice %arg7[%18, %c6_i32] : memref<2x8x!tpu.dma_semaphore, #tpu.memory_space<semaphore_mem>> -> memref<1x1x!tpu.dma_semaphore, #tpu.memory_space<semaphore_mem>>
    %60 = tpu.memref_squeeze %59 : memref<1x1x!tpu.dma_semaphore, #tpu.memory_space<semaphore_mem>> -> memref<!tpu.dma_semaphore, #tpu.memory_space<semaphore_mem>>
    tpu.wait_dma2 semaphore(%60 : memref<!tpu.dma_semaphore, #tpu.memory_space<semaphore_mem>>) src(%56 : memref<1x256xf32, #tpu.memory_space<any>>) dst(%58 : memref<1x256xf32, #tpu.memory_space<vmem>>)
    %c0_i32_47 = arith.constant 0 : i32
    %c7_i32 = arith.constant 7 : i32
    %c0_i32_48 = arith.constant 0 : i32
    %c0_i32_49 = arith.constant 0 : i32
    %61 = tpu.memref_slice %arg3[%c0_i32_47, %c0_i32_48, %c0_i32_49] : memref<8x4x256xf32, #tpu.memory_space<any>> -> memref<1x1x256xf32, #tpu.memory_space<any>>
    %62 = tpu.memref_squeeze %61 : memref<1x1x256xf32, #tpu.memory_space<any>> -> memref<1x256xf32, #tpu.memory_space<any>>
    %c7_i32_50 = arith.constant 7 : i32
    %c0_i32_51 = arith.constant 0 : i32
    %63 = tpu.memref_slice %arg6[%18, %c7_i32_50, %c0_i32_51] : memref<2x8x256xf32, #tpu.memory_space<vmem>> -> memref<1x1x256xf32, #tpu.memory_space<vmem>>
    %64 = tpu.memref_squeeze %63 : memref<1x1x256xf32, #tpu.memory_space<vmem>> -> memref<1x256xf32, #tpu.memory_space<vmem>>
    %65 = tpu.memref_slice %arg7[%18, %c7_i32] : memref<2x8x!tpu.dma_semaphore, #tpu.memory_space<semaphore_mem>> -> memref<1x1x!tpu.dma_semaphore, #tpu.memory_space<semaphore_mem>>
    %66 = tpu.memref_squeeze %65 : memref<1x1x!tpu.dma_semaphore, #tpu.memory_space<semaphore_mem>> -> memref<!tpu.dma_semaphore, #tpu.memory_space<semaphore_mem>>
    tpu.wait_dma2 semaphore(%66 : memref<!tpu.dma_semaphore, #tpu.memory_space<semaphore_mem>>) src(%62 : memref<1x256xf32, #tpu.memory_space<any>>) dst(%64 : memref<1x256xf32, #tpu.memory_space<vmem>>)
    %67 = arith.index_cast %18 : i32 to index
    %c0 = arith.constant 0 : index
    %c0_52 = arith.constant 0 : index
    %68 = vector.load %arg6[%67, %c0, %c0_52] : memref<2x8x256xf32, #tpu.memory_space<vmem>>, vector<1x8x256xf32>
    %69 = vector.shape_cast %68 : vector<1x8x256xf32> to vector<8x256xf32>
    %c0_53 = arith.constant 0 : index
    %c0_54 = arith.constant 0 : index
    %70 = vector.load %arg4[%c0_53, %c0_54] : memref<8x256xf32, #tpu.memory_space<vmem>>, vector<8x256xf32>
    %cst = arith.constant 0.000000e+00 : f32
    %71 = vector.broadcast %cst : f32 to vector<8x256xf32>
    %72 = arith.maximumf %69, %71 : vector<8x256xf32>
    %73 = arith.mulf %69, %70 : vector<8x256xf32>
    %74 = arith.subf %72, %73 : vector<8x256xf32>
    %75 = math.absf %69 : vector<8x256xf32>
    %cst_55 = arith.constant 0.000000e+00 : f32
    %76 = vector.broadcast %cst_55 : f32 to vector<8x256xf32>
    %77 = arith.subf %76, %75 : vector<8x256xf32>
    %78 = math.exp %77 : vector<8x256xf32>
    %79 = math.log1p %78 : vector<8x256xf32>
    %80 = arith.addf %74, %79 : vector<8x256xf32>
    %c0_i32_56 = arith.constant 0 : i32
    %81 = arith.cmpi eq, %arg1, %c0_i32_56 : i32
    %82 = arith.extui %81 : i1 to i32
    %c0_i32_57 = arith.constant 0 : i32
    %83 = arith.cmpi ne, %82, %c0_i32_57 : i32
    scf.if %83 {
      %cst_65 = arith.constant 0.000000e+00 : f32
      %90 = vector.broadcast %cst_65 : f32 to vector<1x1x256xf32>
      %c0_66 = arith.constant 0 : index
      %c0_67 = arith.constant 0 : index
      %c0_68 = arith.constant 0 : index
      %91 = vector.load %arg5[%c0_66, %c0_67, %c0_68] : memref<1x1x256xf32, #tpu.memory_space<vmem>>, vector<1x1x256xf32>
      tpu.vector_store %arg5[%c0_66, %c0_67, %c0_68], %90 {strides = array<i32>} : memref<1x1x256xf32, #tpu.memory_space<vmem>>, vector<1x1x256xf32>,
    } else {
    }
    %c0_58 = arith.constant 0 : index
    %c0_59 = arith.constant 0 : index
    %c0_60 = arith.constant 0 : index
    %84 = vector.load %arg5[%c0_58, %c0_59, %c0_60] : memref<1x1x256xf32, #tpu.memory_space<vmem>>, vector<1x1x256xf32>
    %cst_61 = arith.constant dense<0.000000e+00> : vector<256xf32>
    %85 = vector.multi_reduction <add>, %80, %cst_61 [0] : vector<8x256xf32> to vector<256xf32>
    %86 = vector.shape_cast %85 : vector<256xf32> to vector<1x256xf32>
    %87 = vector.shape_cast %86 : vector<1x256xf32> to vector<1x1x256xf32>
    %88 = arith.addf %84, %87 : vector<1x1x256xf32>
    %c0_62 = arith.constant 0 : index
    %c0_63 = arith.constant 0 : index
    %c0_64 = arith.constant 0 : index
    %89 = vector.load %arg5[%c0_62, %c0_63, %c0_64] : memref<1x1x256xf32, #tpu.memory_space<vmem>>, vector<1x1x256xf32>
    tpu.vector_store %arg5[%c0_62, %c0_63, %c0_64], %88 {strides = array<i32>} : memref<1x1x256xf32, #tpu.memory_space<vmem>>, vector<1x1x256xf32>,
    return
  }
  func.func @transform_1(%arg0: i32, %arg1: i32, %arg2: memref<8xi32, #tpu.memory_space<smem>>) -> (i32, i32) {
    %c1_i32 = arith.constant 1 : i32
    %0 = arith.muli %arg0, %c1_i32 : i32
    %1 = arith.addi %0, %arg1 : i32
    %c0_i32 = arith.constant 0 : i32
    %c0_i32_0 = arith.constant 0 : i32
    return %1, %c0_i32 : i32, i32
  }
  func.func @transform_2(%arg0: i32, %arg1: i32, %arg2: memref<8xi32, #tpu.memory_space<smem>>) -> (i32, i32, i32) {
    %c0_i32 = arith.constant 0 : i32
    %c0_i32_0 = arith.constant 0 : i32
    %c0_i32_1 = arith.constant 0 : i32
    return %arg0, %c0_i32, %c0_i32_0 : i32, i32, i32
  }
}

</mosaic_0001>

<llo_original>
// kernel: tpu_custom_call.1
$region0: #{tpu_custom_call.1}
  #allocation0 [shape = 'u32[]', space=smem, size = 0x4, offset = 0x4, fixed_abs, tag = 'smem constant byte address 0x4 - core index']
  #allocation1 [shape = 'u32[144,128]{1,0:T(1,128)}', space=vmem, size = 0x12000, scoped, tag = 'internal scratch']
  #allocation2 [shape = 'f32[2,8,256]{2,1,0:T(8,128)}', space=vmem, size = 0x4000, scoped, tag = 'scratch operand']
  #allocation3 [shape = 's32[16]{0}', space=sflag, size = 0x40, scoped, tag = 'scratch operand']
  #allocation4 [shape = 's32[1]{0}', space=sflag, size = 0x4, scoped, tag = 'scoped memory for tpu_custom_call.1']
  #allocation5 [shape = 'u8[512]{0}', space=smem, size = 0x200, scoped, tag = 'prefetched SMEM operand 0']
  #allocation10 [shape = 's32[]', space=sflag, size = 0x4, offset = 0, fixed_abs, tag = 'sflag constant byte address 0x0 - dummy sync flag']
  #allocation11 [shape = 's32[]', space=sflag, size = 0x4, offset = 0, fixed_abs, tag = 'sflag constant byte address 0x0 - dummy sync flag']
  #allocation12 [shape = 's32[]', space=sflag, size = 0x4, offset = 0, fixed_abs, tag = 'sflag constant byte address 0x0 - dummy sync flag']
  #allocation13 [shape = 's32[]', space=sflag, size = 0x4, offset = 0, fixed_abs, tag = 'sflag constant byte address 0x0 - dummy sync flag']
  #allocation14 [shape = 's32[]', space=sflag, size = 0x4, offset = 0, fixed_abs, tag = 'sflag constant byte address 0x0 - dummy sync flag']
  #allocation15 [shape = 's32[]', space=sflag, size = 0x4, offset = 0, fixed_abs, tag = 'sflag constant byte address 0x0 - dummy sync flag']
  #allocation16 [shape = 's32[]', space=sflag, size = 0x4, offset = 0, fixed_abs, tag = 'sflag constant byte address 0x0 - dummy sync flag']
  #allocation17 [shape = 's32[]', space=sflag, size = 0x4, offset = 0, fixed_abs, tag = 'sflag constant byte address 0x0 - dummy sync flag']
  #allocation18 [shape = 's32[]', space=sflag, size = 0x4, offset = 0, fixed_abs, tag = 'sflag constant byte address 0x0 - dummy sync flag']
  #allocation19 [shape = 's32[]', space=sflag, size = 0x4, offset = 0, fixed_abs, tag = 'sflag constant byte address 0x0 - dummy sync flag']
  #allocation20 [shape = 's32[]', space=sflag, size = 0x4, offset = 0, fixed_abs, tag = 'sflag constant byte address 0x0 - dummy sync flag']
  #allocation21 [shape = 's32[]', space=sflag, size = 0x4, offset = 0, fixed_abs, tag = 'sflag constant byte address 0x0 - dummy sync flag']
  #allocation22 [shape = 's32[]', space=sflag, size = 0x4, offset = 0, fixed_abs, tag = 'sflag constant byte address 0x0 - dummy sync flag']
  #allocation23 [shape = 's32[]', space=sflag, size = 0x4, offset = 0, fixed_abs, tag = 'sflag constant byte address 0x0 - dummy sync flag']
  #allocation24 [shape = 's32[]', space=sflag, size = 0x4, offset = 0, fixed_abs, tag = 'sflag constant byte address 0x0 - dummy sync flag']
  #allocation25 [shape = 's32[]', space=sflag, size = 0x4, offset = 0, fixed_abs, tag = 'sflag constant byte address 0x0 - dummy sync flag']
  %s0 = inlined_call_operand.hbm [shape: s32[8], index: 0, kind: input, shape index: {}]
  %s1 = inlined_call_operand.hbm [shape: f32[8,4,256], index: 1, kind: input, shape index: {}]
  %s2 = inlined_call_operand.hbm [shape: f32[8,256], index: 2, kind: input, shape index: {}]
  %s3 = inlined_call_operand.hbm [shape: f32[1,1,256], index: 3, kind: output, shape index: {}]
  %s4 = sld [smem:[#allocation0]]
  $region30: #{tpu_custom_call.1} parent=0
    _
  %s6 = ssub.s32 1, %s4
  %s7 = scalar_select 0, %s6, %s4
  %9 = dma.hbm_to_smem %s0, 16, [#allocation5], [#allocation4]
  %10 = dma.done [#allocation4], 16
  %11 = sfence
  $region1: #{tpu_custom_call.1} parent=0
    #allocation6 [shape = 'u8[8192]{0}', space=vmem, size = 0x2000, scoped, tag = 'input window, operand 2, single buffered']
    #allocation7 [shape = 's32[1]{0}', space=sflag, size = 0x4, scoped, tag = 'scoped memory for tpu_custom_call.1']
    #allocation8 [shape = 's32[1]{0}', space=sflag, size = 0x4, scoped, tag = 'scoped memory for tpu_custom_call.1']
    #allocation9 [shape = 'u8[1024]{0}', space=vmem, size = 0x400, scoped, tag = 'output window, operand 0, single buffered']
    %12 = vsyncpa [#allocation7], 0
    %13 = vsyncpa [#allocation8], 0
    // Predicated region
    $region2: #{tpu_custom_call.1} parent=1 // pred_check
      _
    $region3: #{tpu_custom_call.1} parent=1 // pred_check_branch
      %15 = sbr.rel (0) target = $region5
    $region4: #{tpu_custom_call.1} parent=1 // pred_region
      %s16 = sadd.s32 0, 0
      %s18 = ssub.s32 256, 256
      %19 = vsyncadd [#allocation7], %s18
      %s20 = smul.addr %s16, 2
      %s21 = smul.addr %s20, 128
      %s22 = scalar_lea.hbm %s2, %s21
      %s24 = sshll.u32 [#allocation6], 4
      %s25 = int_to_ptr.vmem [resolvable:$true] %s24
      %27 = dma.hbm_to_vmem [thread:$0]  %s22, 256, %s25, [#allocation7]
    $region5: #{tpu_custom_call.1} parent=1 // pred_fallthru
      _
    // Predicated region
    $region6: #{tpu_custom_call.1} parent=1 // pred_check
      _
    $region7: #{tpu_custom_call.1} parent=1 // pred_check_branch
      %29 = sbr.rel (0) target = $region9
    $region8: #{tpu_custom_call.1} parent=1 // pred_region
      %30 = dma.done [#allocation7], 256
    $region9: #{tpu_custom_call.1} parent=1 // pred_fallthru
      _
    %s31 = sadd.s32 0, 0
    %s32 = sadd.s32 0, 0
    %p33 = scmp.eq.s32.totalorder 0, 0
    // Predicated region
    $region10: #{tpu_custom_call.1} parent=1 // pred_check
      %p34 = pneg %p33
    $region11: #{tpu_custom_call.1} parent=1 // pred_check_branch
      %36 = sbr.rel (%p34) target = $region13
    $region12: #{tpu_custom_call.1} parent=1 // pred_region
      %s37 = smul.u32 %s32, 8
      %p38 = scmp.lt.s32.totalorder %s37, 7
      %s39 = scalar_select %p38, %s37, 7
      %s40 = sld [smem:[#allocation5 + %s39]]
      %s41 = sshrl.u32 %s40, 2
      %s42 = sand.u32 %s40, 3
      %s43 = smul.u32 %s41, 8
      %s44 = sadd.s32 %s42, %s43
      %s45 = smul.u32 %s39, 8
      %s46 = sadd.s32 %s44, %s45
      %s47 = smul.addr %s46, 16
      %s48 = scalar_lea.hbm %s1, %s47
      %s50 = sshll.u32 [#allocation2], 4
      %s51 = int_to_ptr.vmem [resolvable:$true] %s50
      %53 = dma.hbm_to_vmem [thread:$0]  %s48, 32, %s51, [#allocation3], 64, 128, 1
      %s54 = sadd.s32 %s37, 1
      %p55 = scmp.lt.s32.totalorder %s54, 7
      %s56 = scalar_select %p55, %s54, 7
      %s57 = sld [smem:[#allocation5 + %s56]]
      %s58 = sshrl.u32 %s57, 2
      %s59 = sand.u32 %s57, 3
      %s60 = smul.u32 %s58, 8
      %s61 = sadd.s32 %s59, %s60
      %s62 = smul.u32 %s56, 8
      %s63 = sadd.s32 %s61, %s62
      %s64 = smul.addr %s63, 16
      %s65 = scalar_lea.hbm %s1, %s64
      %s66 = scalar_lea.vmem [#allocation2], 1
      %s67 = scalar_lea.sflag [#allocation3], 1
      %s69 = sshll.u32 %s66, 4
      %s70 = int_to_ptr.vmem [resolvable:$true] %s69
      %72 = dma.hbm_to_vmem [thread:$0]  %s65, 32, %s70, %s67, 64, 128, 1
      %s73 = sadd.s32 %s37, 2
      %p74 = scmp.lt.s32.totalorder %s73, 7
      %s75 = scalar_select %p74, %s73, 7
      %s76 = sld [smem:[#allocation5 + %s75]]
      %s77 = sshrl.u32 %s76, 2
      %s78 = sand.u32 %s76, 3
      %s79 = smul.u32 %s77, 8
      %s80 = sadd.s32 %s78, %s79
      %s81 = smul.u32 %s75, 8
      %s82 = sadd.s32 %s80, %s81
      %s83 = smul.addr %s82, 16
      %s84 = scalar_lea.hbm %s1, %s83
      %s85 = scalar_lea.vmem [#allocation2], 2
      %s86 = scalar_lea.sflag [#allocation3], 2
      %s88 = sshll.u32 %s85, 4
      %s89 = int_to_ptr.vmem [resolvable:$true] %s88
      %91 = dma.hbm_to_vmem [thread:$0]  %s84, 32, %s89, %s86, 64, 128, 1
      %s92 = sadd.s32 %s37, 3
      %p93 = scmp.lt.s32.totalorder %s92, 7
      %s94 = scalar_select %p93, %s92, 7
      %s95 = sld [smem:[#allocation5 + %s94]]
      %s96 = sshrl.u32 %s95, 2
      %s97 = sand.u32 %s95, 3
      %s98 = smul.u32 %s96, 8
      %s99 = sadd.s32 %s97, %s98
      %s100 = smul.u32 %s94, 8
      %s101 = sadd.s32 %s99, %s100
      %s102 = smul.addr %s101, 16
      %s103 = scalar_lea.hbm %s1, %s102
      %s104 = scalar_lea.vmem [#allocation2], 3
      %s105 = scalar_lea.sflag [#allocation3], 3
      %s107 = sshll.u32 %s104, 4
      %s108 = int_to_ptr.vmem [resolvable:$true] %s107
      %110 = dma.hbm_to_vmem [thread:$0]  %s103, 32, %s108, %s105, 64, 128, 1
      %s111 = sadd.s32 %s37, 4
      %p112 = scmp.lt.s32.totalorder %s111, 7
      %s113 = scalar_select %p112, %s111, 7
      %s114 = sld [smem:[#allocation5 + %s113]]
      %s115 = sshrl.u32 %s114, 2
      %s116 = sand.u32 %s114, 3
      %s117 = smul.u32 %s115, 8
      %s118 = sadd.s32 %s116, %s117
      %s119 = smul.u32 %s113, 8
      %s120 = sadd.s32 %s118, %s119
      %s121 = smul.addr %s120, 16
      %s122 = scalar_lea.hbm %s1, %s121
      %s123 = scalar_lea.vmem [#allocation2], 4
      %s124 = scalar_lea.sflag [#allocation3], 4
      %s126 = sshll.u32 %s123, 4
      %s127 = int_to_ptr.vmem [resolvable:$true] %s126
      %129 = dma.hbm_to_vmem [thread:$0]  %s122, 32, %s127, %s124, 64, 128, 1
      %s130 = sadd.s32 %s37, 5
      %p131 = scmp.lt.s32.totalorder %s130, 7
      %s132 = scalar_select %p131, %s130, 7
      %s133 = sld [smem:[#allocation5 + %s132]]
      %s134 = sshrl.u32 %s133, 2
      %s135 = sand.u32 %s133, 3
      %s136 = smul.u32 %s134, 8
      %s137 = sadd.s32 %s135, %s136
      %s138 = smul.u32 %s132, 8
      %s139 = sadd.s32 %s137, %s138
      %s140 = smul.addr %s139, 16
      %s141 = scalar_lea.hbm %s1, %s140
      %s142 = scalar_lea.vmem [#allocation2], 5
      %s143 = scalar_lea.sflag [#allocation3], 5
      %s145 = sshll.u32 %s142, 4
      %s146 = int_to_ptr.vmem [resolvable:$true] %s145
      %148 = dma.hbm_to_vmem [thread:$0]  %s141, 32, %s146, %s143, 64, 128, 1
      %s149 = sadd.s32 %s37, 6
      %p150 = scmp.lt.s32.totalorder %s149, 7
      %s151 = scalar_select %p150, %s149, 7
      %s152 = sld [smem:[#allocation5 + %s151]]
      %s153 = sshrl.u32 %s152, 2
      %s154 = sand.u32 %s152, 3
      %s155 = smul.u32 %s153, 8
      %s156 = sadd.s32 %s154, %s155
      %s157 = smul.u32 %s151, 8
      %s158 = sadd.s32 %s156, %s157
      %s159 = smul.addr %s158, 16
      %s160 = scalar_lea.hbm %s1, %s159
      %s161 = scalar_lea.vmem [#allocation2], 6
      %s162 = scalar_lea.sflag [#allocation3], 6
      %s164 = sshll.u32 %s161, 4
      %s165 = int_to_ptr.vmem [resolvable:$true] %s164
      %167 = dma.hbm_to_vmem [thread:$0]  %s160, 32, %s165, %s162, 64, 128, 1
      %s168 = sadd.s32 %s37, 7
      %p169 = scmp.lt.s32.totalorder %s168, 7
      %s170 = scalar_select %p169, %s168, 7
      %s171 = sld [smem:[#allocation5 + %s170]]
      %s172 = sshrl.u32 %s171, 2
      %s173 = sand.u32 %s171, 3
      %s174 = smul.u32 %s172, 8
      %s175 = sadd.s32 %s173, %s174
      %s176 = smul.u32 %s170, 8
      %s177 = sadd.s32 %s175, %s176
      %s178 = smul.addr %s177, 16
      %s179 = scalar_lea.hbm %s1, %s178
      %s180 = scalar_lea.vmem [#allocation2], 7
      %s181 = scalar_lea.sflag [#allocation3], 7
      %s183 = sshll.u32 %s180, 4
      %s184 = int_to_ptr.vmem [resolvable:$true] %s183
      %186 = dma.hbm_to_vmem [thread:$0]  %s179, 32, %s184, %s181, 64, 128, 1
    $region13: #{tpu_custom_call.1} parent=1 // pred_fallthru
      _
    %s187 = sadd.s32 0, 1
    %p188 = scmp.lt.s32.totalorder %s187, 1
    // Predicated region
    $region14: #{tpu_custom_call.1} parent=1 // pred_check
      %p189 = pneg %p188
    $region15: #{tpu_custom_call.1} parent=1 // pred_check_branch
      %191 = sbr.rel (%p189) target = $region17
    $region16: #{tpu_custom_call.1} parent=1 // pred_region
      %s192 = sadd.s32 %s32, 1
      %p193 = scmp.lt.s32.totalorder %s187, 0
      %s194 = ssub.s32 0, %s187
      %s195 = scalar_select %p193, %s194, %s187
      %s196 = sand.u32 %s195, 1
      %s197 = ssub.s32 0, %s196
      %s198 = scalar_select %p193, %s197, %s196
      %p199 = scmp.ne.s32.totalorder %s198, 0
      %p200 = scmp.lt.s32.totalorder %s198, 0
      %p201 = pnand %p200, %p199
      %p202 = pneg %p201
      %s203 = sadd.s32 %s198, 2
      %s204 = scalar_select %p202, %s203, %s198
      %s205 = smul.u32 %s192, 8
      %p206 = scmp.lt.s32.totalorder %s205, 7
      %s207 = scalar_select %p206, %s205, 7
      %s208 = sld [smem:[#allocation5 + %s207]]
      %s209 = sshrl.u32 %s208, 2
      %s210 = sand.u32 %s208, 3
      %s211 = smul.u32 %s209, 8
      %s212 = sadd.s32 %s210, %s211
      %s213 = smul.u32 %s207, 8
      %s214 = sadd.s32 %s212, %s213
      %s215 = smul.addr %s214, 16
      %s216 = scalar_lea.hbm %s1, %s215
      %s217 = smul.u32 %s204, 16
      %s218 = scalar_lea.vmem [#allocation2], %s217
      %s219 = smul.u32 %s204, 8
      %s220 = scalar_lea.sflag [#allocation3], %s219
      %s222 = sshll.u32 %s218, 4
      %s223 = int_to_ptr.vmem [resolvable:$true] %s222
      %225 = dma.hbm_to_vmem [thread:$0]  %s216, 32, %s223, %s220, 64, 128, 1
      %s226 = sadd.s32 %s205, 1
      %p227 = scmp.lt.s32.totalorder %s226, 7
      %s228 = scalar_select %p227, %s226, 7
      %s229 = sld [smem:[#allocation5 + %s228]]
      %s230 = sshrl.u32 %s229, 2
      %s231 = sand.u32 %s229, 3
      %s232 = smul.u32 %s230, 8
      %s233 = sadd.s32 %s231, %s232
      %s234 = smul.u32 %s228, 8
      %s235 = sadd.s32 %s233, %s234
      %s236 = smul.addr %s235, 16
      %s237 = scalar_lea.hbm %s1, %s236
      %s238 = sadd.s32 1, %s217
      %s239 = scalar_lea.vmem [#allocation2], %s238
      %s240 = sadd.s32 1, %s219
      %s241 = scalar_lea.sflag [#allocation3], %s240
      %s243 = sshll.u32 %s239, 4
      %s244 = int_to_ptr.vmem [resolvable:$true] %s243
      %246 = dma.hbm_to_vmem [thread:$0]  %s237, 32, %s244, %s241, 64, 128, 1
      %s247 = sadd.s32 %s205, 2
      %p248 = scmp.lt.s32.totalorder %s247, 7
      %s249 = scalar_select %p248, %s247, 7
      %s250 = sld [smem:[#allocation5 + %s249]]
      %s251 = sshrl.u32 %s250, 2
      %s252 = sand.u32 %s250, 3
      %s253 = smul.u32 %s251, 8
      %s254 = sadd.s32 %s252, %s253
      %s255 = smul.u32 %s249, 8
      %s256 = sadd.s32 %s254, %s255
      %s257 = smul.addr %s256, 16
      %s258 = scalar_lea.hbm %s1, %s257
      %s259 = sadd.s32 2, %s217
      %s260 = scalar_lea.vmem [#allocation2], %s259
      %s261 = sadd.s32 2, %s219
      %s262 = scalar_lea.sflag [#allocation3], %s261
      %s264 = sshll.u32 %s260, 4
      %s265 = int_to_ptr.vmem [resolvable:$true] %s264
      %267 = dma.hbm_to_vmem [thread:$0]  %s258, 32, %s265, %s262, 64, 128, 1
      %s268 = sadd.s32 %s205, 3
      %p269 = scmp.lt.s32.totalorder %s268, 7
      %s270 = scalar_select %p269, %s268, 7
      %s271 = sld [smem:[#allocation5 + %s270]]
      %s272 = sshrl.u32 %s271, 2
      %s273 = sand.u32 %s271, 3
      %s274 = smul.u32 %s272, 8
      %s275 = sadd.s32 %s273, %s274
      %s276 = smul.u32 %s270, 8
      %s277 = sadd.s32 %s275, %s276
      %s278 = smul.addr %s277, 16
      %s279 = scalar_lea.hbm %s1, %s278
      %s280 = sadd.s32 3, %s217
      %s281 = scalar_lea.vmem [#allocation2], %s280
      %s282 = sadd.s32 3, %s219
      %s283 = scalar_lea.sflag [#allocation3], %s282
      %s285 = sshll.u32 %s281, 4
      %s286 = int_to_ptr.vmem [resolvable:$true] %s285
      %288 = dma.hbm_to_vmem [thread:$0]  %s279, 32, %s286, %s283, 64, 128, 1
      %s289 = sadd.s32 %s205, 4
      %p290 = scmp.lt.s32.totalorder %s289, 7
      %s291 = scalar_select %p290, %s289, 7
      %s292 = sld [smem:[#allocation5 + %s291]]
      %s293 = sshrl.u32 %s292, 2
      %s294 = sand.u32 %s292, 3
      %s295 = smul.u32 %s293, 8
      %s296 = sadd.s32 %s294, %s295
      %s297 = smul.u32 %s291, 8
      %s298 = sadd.s32 %s296, %s297
      %s299 = smul.addr %s298, 16
      %s300 = scalar_lea.hbm %s1, %s299
      %s301 = sadd.s32 4, %s217
      %s302 = scalar_lea.vmem [#allocation2], %s301
      %s303 = sadd.s32 4, %s219
      %s304 = scalar_lea.sflag [#allocation3], %s303
      %s306 = sshll.u32 %s302, 4
      %s307 = int_to_ptr.vmem [resolvable:$true] %s306
      %309 = dma.hbm_to_vmem [thread:$0]  %s300, 32, %s307, %s304, 64, 128, 1
      %s310 = sadd.s32 %s205, 5
      %p311 = scmp.lt.s32.totalorder %s310, 7
      %s312 = scalar_select %p311, %s310, 7
      %s313 = sld [smem:[#allocation5 + %s312]]
      %s314 = sshrl.u32 %s313, 2
      %s315 = sand.u32 %s313, 3
      %s316 = smul.u32 %s314, 8
      %s317 = sadd.s32 %s315, %s316
      %s318 = smul.u32 %s312, 8
      %s319 = sadd.s32 %s317, %s318
      %s320 = smul.addr %s319, 16
      %s321 = scalar_lea.hbm %s1, %s320
      %s322 = sadd.s32 5, %s217
      %s323 = scalar_lea.vmem [#allocation2], %s322
      %s324 = sadd.s32 5, %s219
      %s325 = scalar_lea.sflag [#allocation3], %s324
      %s327 = sshll.u32 %s323, 4
      %s328 = int_to_ptr.vmem [resolvable:$true] %s327
      %330 = dma.hbm_to_vmem [thread:$0]  %s321, 32, %s328, %s325, 64, 128, 1
      %s331 = sadd.s32 %s205, 6
      %p332 = scmp.lt.s32.totalorder %s331, 7
      %s333 = scalar_select %p332, %s331, 7
      %s334 = sld [smem:[#allocation5 + %s333]]
      %s335 = sshrl.u32 %s334, 2
      %s336 = sand.u32 %s334, 3
      %s337 = smul.u32 %s335, 8
      %s338 = sadd.s32 %s336, %s337
      %s339 = smul.u32 %s333, 8
      %s340 = sadd.s32 %s338, %s339
      %s341 = smul.addr %s340, 16
      %s342 = scalar_lea.hbm %s1, %s341
      %s343 = sadd.s32 6, %s217
      %s344 = scalar_lea.vmem [#allocation2], %s343
      %s345 = sadd.s32 6, %s219
      %s346 = scalar_lea.sflag [#allocation3], %s345
      %s348 = sshll.u32 %s344, 4
      %s349 = int_to_ptr.vmem [resolvable:$true] %s348
      %351 = dma.hbm_to_vmem [thread:$0]  %s342, 32, %s349, %s346, 64, 128, 1
      %s352 = sadd.s32 %s205, 7
      %p353 = scmp.lt.s32.totalorder %s352, 7
      %s354 = scalar_select %p353, %s352, 7
      %s355 = sld [smem:[#allocation5 + %s354]]
      %s356 = sshrl.u32 %s355, 2
      %s357 = sand.u32 %s355, 3
      %s358 = smul.u32 %s356, 8
      %s359 = sadd.s32 %s357, %s358
      %s360 = smul.u32 %s354, 8
      %s361 = sadd.s32 %s359, %s360
      %s362 = smul.addr %s361, 16
      %s363 = scalar_lea.hbm %s1, %s362
      %s364 = sadd.s32 7, %s217
      %s365 = scalar_lea.vmem [#allocation2], %s364
      %s366 = sadd.s32 7, %s219
      %s367 = scalar_lea.sflag [#allocation3], %s366
      %s369 = sshll.u32 %s365, 4
      %s370 = int_to_ptr.vmem [resolvable:$true] %s369
      %372 = dma.hbm_to_vmem [thread:$0]  %s363, 32, %s370, %s367, 64, 128, 1
    $region17: #{tpu_custom_call.1} parent=1 // pred_fallthru
      _
    %s373 = ssub.s32 0, 0
    %s374 = ssub.s32 0, 0
    %p375 = scmp.ne.s32.totalorder 0, 0
    %p376 = scmp.lt.s32.totalorder 0, 0
    %p377 = pnand %p376, %p375
    %p378 = pneg %p377
    %s379 = sadd.s32 0, 2
    %s380 = scalar_select %p378, %s379, 0
    %s381 = smul.u32 %s380, 8
    %s382 = scalar_lea.sflag [#allocation3], %s381
    %s383 = smul.u32 1, 2
    %s384 = sshll.u32 %s383, 4
    %385 = dma.done %s382, %s384
    %s386 = sadd.s32 1, %s381
    %s387 = scalar_lea.sflag [#allocation3], %s386
    %s388 = sshll.u32 %s383, 4
    %389 = dma.done %s387, %s388
    %s390 = sadd.s32 2, %s381
    %s391 = scalar_lea.sflag [#allocation3], %s390
    %s392 = sshll.u32 %s383, 4
    %393 = dma.done %s391, %s392
    %s394 = sadd.s32 3, %s381
    %s395 = scalar_lea.sflag [#allocation3], %s394
    %s396 = sshll.u32 %s383, 4
    %397 = dma.done %s395, %s396
    %s398 = sadd.s32 4, %s381
    %s399 = scalar_lea.sflag [#allocation3], %s398
    %s400 = sshll.u32 %s383, 4
    %401 = dma.done %s399, %s400
    %s402 = sadd.s32 5, %s381
    %s403 = scalar_lea.sflag [#allocation3], %s402
    %s404 = sshll.u32 %s383, 4
    %405 = dma.done %s403, %s404
    %s406 = sadd.s32 6, %s381
    %s407 = scalar_lea.sflag [#allocation3], %s406
    %s408 = sshll.u32 %s383, 4
    %409 = dma.done %s407, %s408
    %s410 = sadd.s32 7, %s381
    %s411 = scalar_lea.sflag [#allocation3], %s410
    %s412 = sshll.u32 %s383, 4
    %413 = dma.done %s411, %s412
    %s414 = smul.u32 %s380, 2
    %s415 = smul.addr %s414, 8
    %s416 = scalar_lea.vmem [#allocation2], %s415
    %v417 = vld [vmem:[%s416] sm:$0xff]
    %v418 = vld [vmem:[%s416 + $0x8] sm:$0xff]
    %v419 = vld [vmem:[#allocation6] sm:$0xff]
    %v420 = vld [vmem:[#allocation6 + $0x8] sm:$0xff]
    %v421 = vmax.f32 %v417, 0.0
    %v422 = vmax.f32 %v418, 0.0
    %v423 = vmul.f32 %v417, %v419
    %v424 = vmul.f32 %v418, %v420
    %v425 = vsub.f32 %v421, %v423
    %v426 = vsub.f32 %v422, %v424
    %v427 = vand.u32 2147483647, %v417
    %v428 = vand.u32 2147483647, %v418
    %v429 = vsub.f32 0.0, %v427
    %v430 = vsub.f32 0.0, %v428
    %v431 = vmul.f32 %v429, 1.442695
    %v432 = vpow.pop %v431
    %v433 = vmul.f32 %v430, 1.442695
    %v434 = vpow.pop %v433
    %v435 = vadd.f32 %v432, 1.0
    %v436 = vlog2.pop %v435
    %v437 = vmul.f32 %v436, 0.6931472
    %v438 = vmul.f32 -0.5, %v432
    %v439 = vadd.f32 %v438, 1.0
    %v440 = vmul.f32 %v439, %v432
    %v441 = vand.u32 2147483647, %v432
    %vm442 = vcmp.lt.f32.partialorder %v441, 0.0004427343
    %v443 = vsel %vm442, %v440, %v437
    %v444 = vadd.f32 %v434, 1.0
    %v445 = vlog2.pop %v444
    %v446 = vmul.f32 %v445, 0.6931472
    %v447 = vmul.f32 -0.5, %v434
    %v448 = vadd.f32 %v447, 1.0
    %v449 = vmul.f32 %v448, %v434
    %v450 = vand.u32 2147483647, %v434
    %vm451 = vcmp.lt.f32.partialorder %v450, 0.0004427343
    %v452 = vsel %vm451, %v449, %v446
    %v453 = vadd.f32 %v425, %v443
    %v454 = vadd.f32 %v426, %v452
    // Predicated region
    $region18: #{tpu_custom_call.1} parent=1 // pred_check
      %p455 = pneg %p33
    $region19: #{tpu_custom_call.1} parent=1 // pred_check_branch
      %457 = sbr.rel (%p455) target = $region21
    $region20: #{tpu_custom_call.1} parent=1 // pred_region
      %v458 = vlaneseq
      %vm459 = vcmp.ge.s32.totalorder %v458, 0
      %vm460 = vcmp.lt.s32.totalorder %v458, 256
      %vm461 = vmand %vm459, %vm460
      %462 = vst.msk [vmem:[#allocation9] sm:$0x3] %vm461, 0.0
    $region21: #{tpu_custom_call.1} parent=1 // pred_fallthru
      _
    %v463 = vld [vmem:[#allocation9] sm:$0x3]
    %v464 = vrot.slane %v453, 4
    %v465 = vadd.f32 %v453, %v464
    %v466 = vrot.slane %v465, 2
    %v467 = vadd.f32 %v465, %v466
    %v468 = vrot.slane %v467, 1
    %v469 = vadd.f32 %v467, %v468
    %v470 = vrot.slane %v454, 4
    %v471 = vadd.f32 %v454, %v470
    %v472 = vrot.slane %v471, 2
    %v473 = vadd.f32 %v471, %v472
    %v474 = vrot.slane %v473, 1
    %v475 = vadd.f32 %v473, %v474
    %v478 = vcombine.low %v469, %v475
    %v480 = vunpack.c.l.s4 1966171168
    %v481 = vunpack.c.0.s8 %v480
    %v482 = vlaneseq
    %v483 = vshrl.u32 %v482, 7
    %v484 = vsub.s32 %v481, %v483
    %v485 = vrot.slane %v478, %v484
    %v487 = vunpack.c.l.s4 1966171168
    %v488 = vunpack.c.0.s8 %v487
    %v489 = vlaneseq
    %v490 = vshrl.u32 %v489, 7
    %v491 = vsub.s32 %v488, %v490
    %v492 = vrot.slane %v485, %v491
    %v494 = vadd.f32 %v463, %v492
    %v495 = vlaneseq
    %vm496 = vcmp.ge.s32.totalorder %v495, 0
    %vm497 = vcmp.lt.s32.totalorder %v495, 256
    %vm498 = vmand %vm496, %vm497
    %499 = vst.msk [vmem:[#allocation9] sm:$0x3] %vm498, %v494
    // Predicated region
    $region22: #{tpu_custom_call.1} parent=1 // pred_check
      _
    $region23: #{tpu_custom_call.1} parent=1 // pred_check_branch
      %501 = sbr.rel (0) target = $region25
    $region24: #{tpu_custom_call.1} parent=1 // pred_region
      %s503 = ssub.s32 32, 32
      %504 = vsyncadd [#allocation8], %s503
      %s506 = sshll.u32 [#allocation9], 4
      %s507 = int_to_ptr.vmem [resolvable:$true] %s506
      %509 = dma.vmem_to_hbm [thread:$0]  %s507, 32, %s3, [#allocation8]
    $region25: #{tpu_custom_call.1} parent=1 // pred_fallthru
      _
    // Predicated region
    $region26: #{tpu_custom_call.1} parent=1 // pred_check
      _
    $region27: #{tpu_custom_call.1} parent=1 // pred_check_branch
      %511 = sbr.rel (0) target = $region29
    $region28: #{tpu_custom_call.1} parent=1 // pred_region
      %512 = dma.done [#allocation8], 32
    $region29: #{tpu_custom_call.1} parent=1 // pred_fallthru
      _
    %513 = vsyncpa [#allocation7], 1
    %514 = vsyncpa [#allocation8], 1
  %515 = vsyncmov [#allocation3]
  %s516 = vpop.sfrf %515
  %p517 = scmp.eq.s32.totalorder %s516, 0
  %p518 = pneg %p517
  %520 = shalt.err (%p518)
  %s521 = scalar_lea.sflag [#allocation3], 1
  %522 = vsyncmov %s521
  %s523 = vpop.sfrf %522
  %p524 = scmp.eq.s32.totalorder %s523, 0
  %p525 = pneg %p524
  %527 = shalt.err (%p525)
  %s528 = scalar_lea.sflag [#allocation3], 2
  %529 = vsyncmov %s528
  %s530 = vpop.sfrf %529
  %p531 = scmp.eq.s32.totalorder %s530, 0
  %p532 = pneg %p531
  %534 = shalt.err (%p532)
  %s535 = scalar_lea.sflag [#allocation3], 3
  %536 = vsyncmov %s535
  %s537 = vpop.sfrf %536
  %p538 = scmp.eq.s32.totalorder %s537, 0
  %p539 = pneg %p538
  %541 = shalt.err (%p539)
  %s542 = scalar_lea.sflag [#allocation3], 4
  %543 = vsyncmov %s542
  %s544 = vpop.sfrf %543
  %p545 = scmp.eq.s32.totalorder %s544, 0
  %p546 = pneg %p545
  %548 = shalt.err (%p546)
  %s549 = scalar_lea.sflag [#allocation3], 5
  %550 = vsyncmov %s549
  %s551 = vpop.sfrf %550
  %p552 = scmp.eq.s32.totalorder %s551, 0
  %p553 = pneg %p552
  %555 = shalt.err (%p553)
  %s556 = scalar_lea.sflag [#allocation3], 6
  %557 = vsyncmov %s556
  %s558 = vpop.sfrf %557
  %p559 = scmp.eq.s32.totalorder %s558, 0
  %p560 = pneg %p559
  %562 = shalt.err (%p560)
  %s563 = scalar_lea.sflag [#allocation3], 7
  %564 = vsyncmov %s563
  %s565 = vpop.sfrf %564
  %p566 = scmp.eq.s32.totalorder %s565, 0
  %p567 = pneg %p566
  %569 = shalt.err (%p567)
  %s570 = scalar_lea.sflag [#allocation3], 8
  %571 = vsyncmov %s570
  %s572 = vpop.sfrf %571
  %p573 = scmp.eq.s32.totalorder %s572, 0
  %p574 = pneg %p573
  %576 = shalt.err (%p574)
  %s577 = scalar_lea.sflag [#allocation3], 9
  %578 = vsyncmov %s577
  %s579 = vpop.sfrf %578
  %p580 = scmp.eq.s32.totalorder %s579, 0
  %p581 = pneg %p580
  %583 = shalt.err (%p581)
  %s584 = scalar_lea.sflag [#allocation3], 10
  %585 = vsyncmov %s584
  %s586 = vpop.sfrf %585
  %p587 = scmp.eq.s32.totalorder %s586, 0
  %p588 = pneg %p587
  %590 = shalt.err (%p588)
  %s591 = scalar_lea.sflag [#allocation3], 11
  %592 = vsyncmov %s591
  %s593 = vpop.sfrf %592
  %p594 = scmp.eq.s32.totalorder %s593, 0
  %p595 = pneg %p594
  %597 = shalt.err (%p595)
  %s598 = scalar_lea.sflag [#allocation3], 12
  %599 = vsyncmov %s598
  %s600 = vpop.sfrf %599
  %p601 = scmp.eq.s32.totalorder %s600, 0
  %p602 = pneg %p601
  %604 = shalt.err (%p602)
  %s605 = scalar_lea.sflag [#allocation3], 13
  %606 = vsyncmov %s605
  %s607 = vpop.sfrf %606
  %p608 = scmp.eq.s32.totalorder %s607, 0
  %p609 = pneg %p608
  %611 = shalt.err (%p609)
  %s612 = scalar_lea.sflag [#allocation3], 14
  %613 = vsyncmov %s612
  %s614 = vpop.sfrf %613
  %p615 = scmp.eq.s32.totalorder %s614, 0
  %p616 = pneg %p615
  %618 = shalt.err (%p616)
  %s619 = scalar_lea.sflag [#allocation3], 15
  %620 = vsyncmov %s619
  %s621 = vpop.sfrf %620
  %p622 = scmp.eq.s32.totalorder %s621, 0
  %p623 = pneg %p622
  %625 = shalt.err (%p623)

</llo_original>
